<compile_context>
chip_gen: v7x
topology: tpu7x:2x2x1
jax: 0.10.0
libtpu: 0.0.40
codegen_flags: <defaults>
</compile_context>

<pallas_src>
import jax
import jax.numpy as jnp
import numpy as np
from jax import lax
from jax.experimental import pallas as pl
from jax.experimental.pallas import tpu as pltpu

GROUPS = 8
EPS = 1e-5


def _make_kernel(dims, K, M, n_layers):
    """dims = [C_in, out_dim_0, ...]; per-layer params: (wT, Et, Eg, beta_col)."""
    N = K * M
    D_last = dims[-1]

    def kernel(x_ref, *refs):
        param_refs = refs[:4 * n_layers]
        out_relu_ref = refs[4 * n_layers]
        out_x_ref = refs[4 * n_layers + 1]

        h = x_ref[0]                                     # (C_in, N), f32 straight from HBM

        for i in range(n_layers):
            wT = param_refs[4 * i][...]                  # (D, C_in), bf16 (or f32)
            Et = param_refs[4 * i + 1][...]              # (G, D)  f32 one-hot (gather)
            Eg = param_refs[4 * i + 2][...]              # (D, G)  f32, gamma folded in
            beta = param_refs[4 * i + 3][...]            # (D, 1)  f32
            D = dims[i + 1]
            cg = D // GROUPS
            inv_cnt = 1.0 / float(N * cg)

            # 1x1 conv (no bias) == channel matmul; bf16 operands, f32 accumulation.
            # Output (D, N): N on lanes -> lane-dense regardless of D.
            y = jnp.dot(wT, h.astype(wT.dtype),
                        preferred_element_type=jnp.float32)              # (D, N) f32

            # GroupNorm(8): all stats in f32.  Tiny one-hot matmuls gather per-group sums
            # and broadcast scale/mean back per channel (gamma folded into Eg).
            s = jnp.sum(y, axis=1, keepdims=True)                        # (D, 1)
            ss = jnp.sum(y * y, axis=1, keepdims=True)                   # (D, 1)
            sum_g = jnp.dot(Et, s, preferred_element_type=jnp.float32)   # (G, 1)
            ssum_g = jnp.dot(Et, ss, preferred_element_type=jnp.float32) # (G, 1)
            mean_g = sum_g * inv_cnt
            # clamp: E[x^2]-E[x]^2 can cancel slightly negative in f32.
            var_g = jnp.maximum(ssum_g * inv_cnt - mean_g * mean_g, 0.0)
            inv_g = lax.rsqrt(var_g + EPS)                               # (G, 1)
            scale = jnp.dot(Eg, inv_g, preferred_element_type=jnp.float32)            # (D,1) gamma*inv
            meaninv = jnp.dot(Eg, mean_g * inv_g, preferred_element_type=jnp.float32) # (D,1)
            shift = beta - meaninv                                       # (D, 1)

            if i != n_layers - 1:
                # fuse GN-apply + ReLU + bf16 cast: activation stays bf16-resident for the
                # next MXU matmul (halves live slab + vld/vst bytes); math itself stays f32.
                h = jnp.maximum(y * scale + shift, 0.0).astype(wT.dtype)
            else:
                # last block (no ReLU in the stack): keep f32, it feeds the outputs.
                h = y * scale + shift                                    # (D_last, N) f32

        # max over K (dim=2 of the original (B, C, K, M) tensor).  h is (D_last, K*M),
        # K-major along the lane axis.  When M % 128 == 0 the reshape is a clean lane
        # retile; otherwise take K static lane-slices and reduce with elementwise max.
        # TODO(synk): pad/arrange M to a multiple of 128 upstream for the retile path.
        if M % 128 == 0:
            x_max = jnp.max(h.reshape(D_last, K, M), axis=1)             # (D_last, M)
        else:
            x_max = h[:, 0:M]
            for k in range(1, K):
                x_max = jnp.maximum(x_max, h[:, k * M:(k + 1) * M])

        # channel-major outputs: no wrapper transpose needed afterwards.
        out_x_ref[0] = x_max                                             # max(x)
        out_relu_ref[0] = jnp.maximum(x_max, 0.0)                        # max(relu(x))

    return kernel


def local_feature_fused(x_nchw, params, out_dims, *, mxu_dtype=jnp.bfloat16):
    """x_nchw: (B, C1, K, M). params: list of (w (Cin,D), gamma (1,D), beta (1,D)).
    Returns (output, x), each (B, C2, M) like the PyTorch module."""
    B, C1, K, M = x_nchw.shape
    N = K * M
    dims = [C1] + list(out_dims)
    n_layers = len(out_dims)
    D_last = out_dims[-1]
    assert all(d % GROUPS == 0 for d in out_dims), "GroupNorm(8) needs channels % 8 == 0"

    # (B, C1, K, M) -> (B, C1, N) is a free view (no HBM pass); no upcast/transpose pass.
    x = x_nchw.reshape(B, C1, N)
    w_dtype = jnp.float32 if mxu_dtype is None else mxu_dtype

    in_specs = [pl.BlockSpec((1, C1, N), lambda b: (b, 0, 0))]
    # TODO(synk): if profiling shows exposed input DMA (shallow stacks / big C1), bump the
    # x spec to pipeline_mode=pl.Buffered(3).
    flat_params = []
    for (w, gamma, beta) in params:
        D = w.shape[1]
        cg = D // GROUPS
        grp = jnp.arange(D, dtype=jnp.int32) // cg
        E = (grp[:, None] == jnp.arange(GROUPS, dtype=jnp.int32)[None, :]).astype(jnp.float32)  # (D,G)
        Et = E.T                                                          # (G, D) gather
        Eg = E * gamma.reshape(D, 1).astype(jnp.float32)                  # (D, G) gamma folded
        wT = jnp.transpose(w).astype(w_dtype)                             # (D, C_in)
        beta_col = beta.reshape(D, 1).astype(jnp.float32)                 # (D, 1)
        layer = [wT, Et, Eg, beta_col]
        flat_params += layer
        for a in layer:
            # all params are 2-D, full-extent blocks, constant across the grid.
            # TODO(synk): single-buffer these constants (pipeline_mode=pl.Buffered(1)) to
            # reclaim VMEM on v7x once that path is validated on the target jax version.
            in_specs.append(pl.BlockSpec(a.shape, lambda b: (0, 0)))

    out_shape = (jax.ShapeDtypeStruct((B, D_last, M), jnp.float32),
                 jax.ShapeDtypeStruct((B, D_last, M), jnp.float32))
    out_specs = [pl.BlockSpec((1, D_last, M), lambda b: (b, 0, 0)),
                 pl.BlockSpec((1, D_last, M), lambda b: (b, 0, 0))]
    # TODO(synk): when per-batch work is small, pack several batch elements per grid step
    # ((Bt, C1, N) blocks with per-batch GN stats) to amortize the ~0.35 us grid overhead.

    # Explicit VMEM budget: double-buffered input + live (D, N) intermediates + params + outputs.
    D_max = max(out_dims)
    act_bytes = 4 if mxu_dtype is None else 2
    est = (2 * N * C1 * x.dtype.itemsize            # input block, double-buffered
           + 3 * N * D_max * 4                      # live f32 y / y*y slabs (+slack)
           + N * D_max * act_bytes                  # bf16-resident activation
           + 2 * 2 * M * D_last * 4                 # two outputs, double-buffered
           + 2 * sum(int(np.prod(a.shape)) * a.dtype.itemsize for a in flat_params))
    try:
        vmem_cap = int(pltpu.get_tpu_info().vmem_capacity_bytes)
    except Exception:
        vmem_cap = 128 << 20
    # ~75% of physical VMEM: ~96 MiB on v5e/v6e (128 MiB), ~48 MiB on v7x (64 MiB per TC).
    vmem_limit = int(min((vmem_cap * 3) // 4, max(32 << 20, 2 * est)))
    # TODO(synk): if ~3*N*D_max*4 approaches the cap, tile N with a two-pass GroupNorm
    # (stats pass accumulating s/ss, then normalize pass) via pltpu.emit_pipeline.

    kernel = _make_kernel(dims, K, M, n_layers)
    out_relu, out_x = pl.pallas_call(
        kernel,
        out_shape=out_shape,
        grid_spec=pltpu.PrefetchScalarGridSpec(
            num_scalar_prefetch=0,
            grid=(B,),
            in_specs=in_specs,
            out_specs=out_specs),
        compiler_params=pltpu.CompilerParams(
            dimension_semantics=("parallel",),   # batch elements independent -> megacore
            vmem_limit_bytes=vmem_limit),
    )(x, *flat_params)

    # already (B, C2, M): no wrapper transposes.
    return out_relu, out_x


def reference(x_nchw, params, out_dims, *, matmul_dtype=None):
    """Pure-JAX reference mirroring the PyTorch forward (NCHW).  matmul_dtype emulates the
    bf16-MXU operand rounding WITHOUT emitting a bf16 x bf16 dot (products of bf16 values
    are exact in f32, so rounding operands + f32 matmul is bit-equivalent up to sum order)."""
    h = x_nchw.astype(jnp.float32)
    B, C1, K, M = x_nchw.shape
    n_layers = len(out_dims)
    for i, (w, g, bta) in enumerate(params):
        D = out_dims[i]
        if matmul_dtype is not None:
            h_mm = h.astype(matmul_dtype).astype(jnp.float32)
            w_mm = w.astype(matmul_dtype).astype(jnp.float32)
        else:
            h_mm, w_mm = h, w.astype(jnp.float32)
        h = jnp.einsum('bckm,cd->bdkm', h_mm, w_mm,
                       preferred_element_type=jnp.float32)       # 1x1 conv, no bias
        cg = D // GROUPS
        hg = h.reshape(B, GROUPS, cg, K, M)
        mean = jnp.mean(hg, axis=(2, 3, 4), keepdims=True)
        var = jnp.mean((hg - mean) ** 2, axis=(2, 3, 4), keepdims=True)
        hg = (hg - mean) / jnp.sqrt(var + EPS)
        h = hg.reshape(B, D, K, M) * g.reshape(1, D, 1, 1) + bta.reshape(1, D, 1, 1)
        if i != n_layers - 1:
            h = jnp.maximum(h, 0.0)
    x_max = jnp.max(h, axis=2)
    out = jnp.max(jnp.maximum(h, 0.0), axis=2)
    return out, x_max


if __name__ == "__main__":
    key = jax.random.PRNGKey(0)
    B, C1, K, M = 2, 4, 8, 16
    out_dims = (16, 32)          # each divisible by 8 (GroupNorm groups)

    key, k_x = jax.random.split(key)
    x = jax.random.normal(k_x, (B, C1, K, M), jnp.float32)

    # deterministic synthetic parameters (conv weight (Cin, D), GN gamma/beta (1, D))
    params = []
    in_dim = C1
    for d in out_dims:
        key, kw, kg, kb = jax.random.split(key, 4)
        w = jax.random.normal(kw, (in_dim, d), jnp.float32) / jnp.sqrt(float(in_dim))
        g = 1.0 + 0.1 * jax.random.normal(kg, (1, d), jnp.float32)
        bta = 0.1 * jax.random.normal(kb, (1, d), jnp.float32)
        params.append((w, g, bta))
        in_dim = d

    # f32 MXU path: must match the full-precision reference tightly.
    out_relu, out_x = local_feature_fused(x, params, out_dims, mxu_dtype=None)
    jax.block_until_ready((out_relu, out_x))
    ref_relu, ref_x = reference(x, params, out_dims)
    np.testing.assert_allclose(np.asarray(out_relu), np.asarray(ref_relu), atol=1e-4, rtol=1e-4)
    np.testing.assert_allclose(np.asarray(out_x), np.asarray(ref_x), atol=1e-4, rtol=1e-4)

    # bf16 MXU path (default, full MXU rate): compare against the bf16-operand-rounding
    # reference (f32 accumulation) — remaining differences are accumulation order only.
    out_relu_bf, out_x_bf = local_feature_fused(x, params, out_dims)   # bf16 default
    jax.block_until_ready((out_relu_bf, out_x_bf))
    ref_relu_bf, ref_x_bf = reference(x, params, out_dims, matmul_dtype=jnp.bfloat16)
    np.testing.assert_allclose(np.asarray(out_relu_bf), np.asarray(ref_relu_bf), atol=2e-3, rtol=2e-3)
    np.testing.assert_allclose(np.asarray(out_x_bf), np.asarray(ref_x_bf), atol=2e-3, rtol=2e-3)

    print("KERNEL_OK")
</pallas_src>

<mosaic_0001>
module attributes {stable_mosaic.version = 11 : i64} {
  func.func @kernel(%arg0: i32, %arg1: memref<1x4x128xf32, #tpu.memory_space<vmem>>, %arg2: memref<16x4xf32, #tpu.memory_space<vmem>>, %arg3: memref<8x16xf32, #tpu.memory_space<vmem>>, %arg4: memref<16x8xf32, #tpu.memory_space<vmem>>, %arg5: memref<16x1xf32, #tpu.memory_space<vmem>>, %arg6: memref<32x16xf32, #tpu.memory_space<vmem>>, %arg7: memref<8x32xf32, #tpu.memory_space<vmem>>, %arg8: memref<32x8xf32, #tpu.memory_space<vmem>>, %arg9: memref<32x1xf32, #tpu.memory_space<vmem>>, %arg10: memref<1x32x16xf32, #tpu.memory_space<vmem>>, %arg11: memref<1x32x16xf32, #tpu.memory_space<vmem>>) attributes {dimension_semantics = [#tpu.dimension_semantics<parallel>], iteration_bounds = array<i64: 2>, scalar_prefetch = 0 : i64, scratch_operands = 0 : i64, tpu.core_type = #tpu.core_type<tc>, window_params = [{transform_indices = @transform_0, window_bounds = array<i64: 1, 4, 128>}, {pipeline_mode = #tpu.pipeline_mode<synchronous>, transform_indices = @transform_1, window_bounds = array<i64: 16, 4>}, {pipeline_mode = #tpu.pipeline_mode<synchronous>, transform_indices = @transform_2, window_bounds = array<i64: 8, 16>}, {pipeline_mode = #tpu.pipeline_mode<synchronous>, transform_indices = @transform_3, window_bounds = array<i64: 16, 8>}, {pipeline_mode = #tpu.pipeline_mode<synchronous>, transform_indices = @transform_4, window_bounds = array<i64: 16, 1>}, {pipeline_mode = #tpu.pipeline_mode<synchronous>, transform_indices = @transform_5, window_bounds = array<i64: 32, 16>}, {pipeline_mode = #tpu.pipeline_mode<synchronous>, transform_indices = @transform_6, window_bounds = array<i64: 8, 32>}, {pipeline_mode = #tpu.pipeline_mode<synchronous>, transform_indices = @transform_7, window_bounds = array<i64: 32, 8>}, {pipeline_mode = #tpu.pipeline_mode<synchronous>, transform_indices = @transform_8, window_bounds = array<i64: 32, 1>}, {transform_indices = @transform_9, window_bounds = array<i64: 1, 32, 16>}, {transform_indices = @transform_10, window_bounds = array<i64: 1, 32, 16>}]} {
    %c0 = arith.constant 0 : index
    %c0_0 = arith.constant 0 : index
    %c0_1 = arith.constant 0 : index
    %0 = vector.load %arg1[%c0, %c0_0, %c0_1] : memref<1x4x128xf32, #tpu.memory_space<vmem>>, vector<1x4x128xf32>
    %1 = vector.shape_cast %0 : vector<1x4x128xf32> to vector<4x128xf32>
    %c0_2 = arith.constant 0 : index
    %c0_3 = arith.constant 0 : index
    %2 = vector.load %arg2[%c0_2, %c0_3] : memref<16x4xf32, #tpu.memory_space<vmem>>, vector<16x4xf32>
    %c0_4 = arith.constant 0 : index
    %c0_5 = arith.constant 0 : index
    %3 = vector.load %arg3[%c0_4, %c0_5] : memref<8x16xf32, #tpu.memory_space<vmem>>, vector<8x16xf32>
    %c0_6 = arith.constant 0 : index
    %c0_7 = arith.constant 0 : index
    %4 = vector.load %arg4[%c0_6, %c0_7] : memref<16x8xf32, #tpu.memory_space<vmem>>, vector<16x8xf32>
    %c0_8 = arith.constant 0 : index
    %c0_9 = arith.constant 0 : index
    %5 = vector.load %arg5[%c0_8, %c0_9] : memref<16x1xf32, #tpu.memory_space<vmem>>, vector<16x1xf32>
    %cst = arith.constant dense<0.000000e+00> : vector<16x128xf32>
    %6 = tpu.matmul %2, %1, %cst {dimension_numbers = #tpu.dot_dimension_numbers<[1], [0], [0], [1], [0, 0, 1, 1], [], []>} : vector<16x4xf32>, vector<4x128xf32>, vector<16x128xf32> -> vector<16x128xf32>
    %cst_10 = arith.constant dense<0.000000e+00> : vector<16xf32>
    %7 = vector.multi_reduction <add>, %6, %cst_10 [1] : vector<16x128xf32> to vector<16xf32>
    %8 = vector.shape_cast %7 : vector<16xf32> to vector<16x1xf32>
    %9 = arith.mulf %6, %6 : vector<16x128xf32>
    %cst_11 = arith.constant dense<0.000000e+00> : vector<16xf32>
    %10 = vector.multi_reduction <add>, %9, %cst_11 [1] : vector<16x128xf32> to vector<16xf32>
    %11 = vector.shape_cast %10 : vector<16xf32> to vector<16x1xf32>
    %cst_12 = arith.constant dense<0.000000e+00> : vector<8x1xf32>
    %12 = tpu.matmul %3, %8, %cst_12 {dimension_numbers = #tpu.dot_dimension_numbers<[1], [0], [0], [1], [0, 0, 1, 1], [], []>} : vector<8x16xf32>, vector<16x1xf32>, vector<8x1xf32> -> vector<8x1xf32>
    %cst_13 = arith.constant dense<0.000000e+00> : vector<8x1xf32>
    %13 = tpu.matmul %3, %11, %cst_13 {dimension_numbers = #tpu.dot_dimension_numbers<[1], [0], [0], [1], [0, 0, 1, 1], [], []>} : vector<8x16xf32>, vector<16x1xf32>, vector<8x1xf32> -> vector<8x1xf32>
    %cst_14 = arith.constant 3.906250e-03 : f32
    %14 = vector.broadcast %cst_14 : f32 to vector<8x1xf32>
    %15 = arith.mulf %12, %14 : vector<8x1xf32>
    %cst_15 = arith.constant 3.906250e-03 : f32
    %16 = vector.broadcast %cst_15 : f32 to vector<8x1xf32>
    %17 = arith.mulf %13, %16 : vector<8x1xf32>
    %18 = arith.mulf %15, %15 : vector<8x1xf32>
    %19 = arith.subf %17, %18 : vector<8x1xf32>
    %cst_16 = arith.constant 0.000000e+00 : f32
    %20 = vector.broadcast %cst_16 : f32 to vector<8x1xf32>
    %21 = arith.maximumf %19, %20 : vector<8x1xf32>
    %cst_17 = arith.constant 9.99999974E-6 : f32
    %22 = vector.broadcast %cst_17 : f32 to vector<8x1xf32>
    %23 = arith.addf %21, %22 : vector<8x1xf32>
    %24 = math.rsqrt %23 : vector<8x1xf32>
    %cst_18 = arith.constant dense<0.000000e+00> : vector<16x1xf32>
    %25 = tpu.matmul %4, %24, %cst_18 {dimension_numbers = #tpu.dot_dimension_numbers<[1], [0], [0], [1], [0, 0, 1, 1], [], []>} : vector<16x8xf32>, vector<8x1xf32>, vector<16x1xf32> -> vector<16x1xf32>
    %26 = arith.mulf %15, %24 : vector<8x1xf32>
    %cst_19 = arith.constant dense<0.000000e+00> : vector<16x1xf32>
    %27 = tpu.matmul %4, %26, %cst_19 {dimension_numbers = #tpu.dot_dimension_numbers<[1], [0], [0], [1], [0, 0, 1, 1], [], []>} : vector<16x8xf32>, vector<8x1xf32>, vector<16x1xf32> -> vector<16x1xf32>
    %28 = arith.subf %5, %27 : vector<16x1xf32>
    %29 = vector.broadcast %25 : vector<16x1xf32> to vector<16x128xf32>
    %30 = arith.mulf %6, %29 : vector<16x128xf32>
    %31 = vector.broadcast %28 : vector<16x1xf32> to vector<16x128xf32>
    %32 = arith.addf %30, %31 : vector<16x128xf32>
    %cst_20 = arith.constant 0.000000e+00 : f32
    %33 = vector.broadcast %cst_20 : f32 to vector<16x128xf32>
    %34 = arith.maximumf %32, %33 : vector<16x128xf32>
    %c0_21 = arith.constant 0 : index
    %c0_22 = arith.constant 0 : index
    %35 = vector.load %arg6[%c0_21, %c0_22] : memref<32x16xf32, #tpu.memory_space<vmem>>, vector<32x16xf32>
    %c0_23 = arith.constant 0 : index
    %c0_24 = arith.constant 0 : index
    %36 = vector.load %arg7[%c0_23, %c0_24] : memref<8x32xf32, #tpu.memory_space<vmem>>, vector<8x32xf32>
    %c0_25 = arith.constant 0 : index
    %c0_26 = arith.constant 0 : index
    %37 = vector.load %arg8[%c0_25, %c0_26] : memref<32x8xf32, #tpu.memory_space<vmem>>, vector<32x8xf32>
    %c0_27 = arith.constant 0 : index
    %c0_28 = arith.constant 0 : index
    %38 = vector.load %arg9[%c0_27, %c0_28] : memref<32x1xf32, #tpu.memory_space<vmem>>, vector<32x1xf32>
    %cst_29 = arith.constant dense<0.000000e+00> : vector<32x128xf32>
    %39 = tpu.matmul %35, %34, %cst_29 {dimension_numbers = #tpu.dot_dimension_numbers<[1], [0], [0], [1], [0, 0, 1, 1], [], []>} : vector<32x16xf32>, vector<16x128xf32>, vector<32x128xf32> -> vector<32x128xf32>
    %cst_30 = arith.constant dense<0.000000e+00> : vector<32xf32>
    %40 = vector.multi_reduction <add>, %39, %cst_30 [1] : vector<32x128xf32> to vector<32xf32>
    %41 = vector.shape_cast %40 : vector<32xf32> to vector<32x1xf32>
    %42 = arith.mulf %39, %39 : vector<32x128xf32>
    %cst_31 = arith.constant dense<0.000000e+00> : vector<32xf32>
    %43 = vector.multi_reduction <add>, %42, %cst_31 [1] : vector<32x128xf32> to vector<32xf32>
    %44 = vector.shape_cast %43 : vector<32xf32> to vector<32x1xf32>
    %cst_32 = arith.constant dense<0.000000e+00> : vector<8x1xf32>
    %45 = tpu.matmul %36, %41, %cst_32 {dimension_numbers = #tpu.dot_dimension_numbers<[1], [0], [0], [1], [0, 0, 1, 1], [], []>} : vector<8x32xf32>, vector<32x1xf32>, vector<8x1xf32> -> vector<8x1xf32>
    %cst_33 = arith.constant dense<0.000000e+00> : vector<8x1xf32>
    %46 = tpu.matmul %36, %44, %cst_33 {dimension_numbers = #tpu.dot_dimension_numbers<[1], [0], [0], [1], [0, 0, 1, 1], [], []>} : vector<8x32xf32>, vector<32x1xf32>, vector<8x1xf32> -> vector<8x1xf32>
    %cst_34 = arith.constant 0.001953125 : f32
    %47 = vector.broadcast %cst_34 : f32 to vector<8x1xf32>
    %48 = arith.mulf %45, %47 : vector<8x1xf32>
    %cst_35 = arith.constant 0.001953125 : f32
    %49 = vector.broadcast %cst_35 : f32 to vector<8x1xf32>
    %50 = arith.mulf %46, %49 : vector<8x1xf32>
    %51 = arith.mulf %48, %48 : vector<8x1xf32>
    %52 = arith.subf %50, %51 : vector<8x1xf32>
    %cst_36 = arith.constant 0.000000e+00 : f32
    %53 = vector.broadcast %cst_36 : f32 to vector<8x1xf32>
    %54 = arith.maximumf %52, %53 : vector<8x1xf32>
    %cst_37 = arith.constant 9.99999974E-6 : f32
    %55 = vector.broadcast %cst_37 : f32 to vector<8x1xf32>
    %56 = arith.addf %54, %55 : vector<8x1xf32>
    %57 = math.rsqrt %56 : vector<8x1xf32>
    %cst_38 = arith.constant dense<0.000000e+00> : vector<32x1xf32>
    %58 = tpu.matmul %37, %57, %cst_38 {dimension_numbers = #tpu.dot_dimension_numbers<[1], [0], [0], [1], [0, 0, 1, 1], [], []>} : vector<32x8xf32>, vector<8x1xf32>, vector<32x1xf32> -> vector<32x1xf32>
    %59 = arith.mulf %48, %57 : vector<8x1xf32>
    %cst_39 = arith.constant dense<0.000000e+00> : vector<32x1xf32>
    %60 = tpu.matmul %37, %59, %cst_39 {dimension_numbers = #tpu.dot_dimension_numbers<[1], [0], [0], [1], [0, 0, 1, 1], [], []>} : vector<32x8xf32>, vector<8x1xf32>, vector<32x1xf32> -> vector<32x1xf32>
    %61 = arith.subf %38, %60 : vector<32x1xf32>
    %62 = vector.broadcast %58 : vector<32x1xf32> to vector<32x128xf32>
    %63 = arith.mulf %39, %62 : vector<32x128xf32>
    %64 = vector.broadcast %61 : vector<32x1xf32> to vector<32x128xf32>
    %65 = arith.addf %63, %64 : vector<32x128xf32>
    %66 = vector.extract_strided_slice %65 {offsets = [0, 0], sizes = [32, 16], strides = [1, 1]} : vector<32x128xf32> to vector<32x16xf32>
    %67 = vector.extract_strided_slice %65 {offsets = [0, 16], sizes = [32, 16], strides = [1, 1]} : vector<32x128xf32> to vector<32x16xf32>
    %68 = arith.maximumf %66, %67 : vector<32x16xf32>
    %69 = vector.extract_strided_slice %65 {offsets = [0, 32], sizes = [32, 16], strides = [1, 1]} : vector<32x128xf32> to vector<32x16xf32>
    %70 = arith.maximumf %68, %69 : vector<32x16xf32>
    %71 = vector.extract_strided_slice %65 {offsets = [0, 48], sizes = [32, 16], strides = [1, 1]} : vector<32x128xf32> to vector<32x16xf32>
    %72 = arith.maximumf %70, %71 : vector<32x16xf32>
    %73 = vector.extract_strided_slice %65 {offsets = [0, 64], sizes = [32, 16], strides = [1, 1]} : vector<32x128xf32> to vector<32x16xf32>
    %74 = arith.maximumf %72, %73 : vector<32x16xf32>
    %75 = vector.extract_strided_slice %65 {offsets = [0, 80], sizes = [32, 16], strides = [1, 1]} : vector<32x128xf32> to vector<32x16xf32>
    %76 = arith.maximumf %74, %75 : vector<32x16xf32>
    %77 = vector.extract_strided_slice %65 {offsets = [0, 96], sizes = [32, 16], strides = [1, 1]} : vector<32x128xf32> to vector<32x16xf32>
    %78 = arith.maximumf %76, %77 : vector<32x16xf32>
    %79 = vector.extract_strided_slice %65 {offsets = [0, 112], sizes = [32, 16], strides = [1, 1]} : vector<32x128xf32> to vector<32x16xf32>
    %80 = arith.maximumf %78, %79 : vector<32x16xf32>
    %c0_40 = arith.constant 0 : index
    %c0_41 = arith.constant 0 : index
    %c0_42 = arith.constant 0 : index
    %81 = vector.load %arg11[%c0_40, %c0_41, %c0_42] : memref<1x32x16xf32, #tpu.memory_space<vmem>>, vector<1x32x16xf32>
    %82 = vector.shape_cast %81 : vector<1x32x16xf32> to vector<32x16xf32>
    %83 = vector.shape_cast %80 : vector<32x16xf32> to vector<1x32x16xf32>
    tpu.vector_store %arg11[%c0_40, %c0_41, %c0_42], %83 {strides = array<i32>} : memref<1x32x16xf32, #tpu.memory_space<vmem>>, vector<1x32x16xf32>,
    %cst_43 = arith.constant 0.000000e+00 : f32
    %84 = vector.broadcast %cst_43 : f32 to vector<32x16xf32>
    %85 = arith.maximumf %80, %84 : vector<32x16xf32>
    %c0_44 = arith.constant 0 : index
    %c0_45 = arith.constant 0 : index
    %c0_46 = arith.constant 0 : index
    %86 = vector.load %arg10[%c0_44, %c0_45, %c0_46] : memref<1x32x16xf32, #tpu.memory_space<vmem>>, vector<1x32x16xf32>
    %87 = vector.shape_cast %86 : vector<1x32x16xf32> to vector<32x16xf32>
    %88 = vector.shape_cast %85 : vector<32x16xf32> to vector<1x32x16xf32>
    tpu.vector_store %arg10[%c0_44, %c0_45, %c0_46], %88 {strides = array<i32>} : memref<1x32x16xf32, #tpu.memory_space<vmem>>, vector<1x32x16xf32>,
    return
  }
  func.func @transform_0(%arg0: i32) -> (i32, i32, i32) {
    %c0_i32 = arith.constant 0 : i32
    %c0_i32_0 = arith.constant 0 : i32
    %c0_i32_1 = arith.constant 0 : i32
    return %arg0, %c0_i32, %c0_i32_0 : i32, i32, i32
  }
  func.func @transform_1(%arg0: i32) -> (i32, i32) {
    %c0_i32 = arith.constant 0 : i32
    %c0_i32_0 = arith.constant 0 : i32
    %c0_i32_1 = arith.constant 0 : i32
    return %c0_i32, %c0_i32_0 : i32, i32
  }
  func.func @transform_2(%arg0: i32) -> (i32, i32) {
    %c0_i32 = arith.constant 0 : i32
    %c0_i32_0 = arith.constant 0 : i32
    %c0_i32_1 = arith.constant 0 : i32
    return %c0_i32, %c0_i32_0 : i32, i32
  }
  func.func @transform_3(%arg0: i32) -> (i32, i32) {
    %c0_i32 = arith.constant 0 : i32
    %c0_i32_0 = arith.constant 0 : i32
    %c0_i32_1 = arith.constant 0 : i32
    return %c0_i32, %c0_i32_0 : i32, i32
  }
  func.func @transform_4(%arg0: i32) -> (i32, i32) {
    %c0_i32 = arith.constant 0 : i32
    %c0_i32_0 = arith.constant 0 : i32
    %c0_i32_1 = arith.constant 0 : i32
    return %c0_i32, %c0_i32_0 : i32, i32
  }
  func.func @transform_5(%arg0: i32) -> (i32, i32) {
    %c0_i32 = arith.constant 0 : i32
    %c0_i32_0 = arith.constant 0 : i32
    %c0_i32_1 = arith.constant 0 : i32
    return %c0_i32, %c0_i32_0 : i32, i32
  }
  func.func @transform_6(%arg0: i32) -> (i32, i32) {
    %c0_i32 = arith.constant 0 : i32
    %c0_i32_0 = arith.constant 0 : i32
    %c0_i32_1 = arith.constant 0 : i32
    return %c0_i32, %c0_i32_0 : i32, i32
  }
  func.func @transform_7(%arg0: i32) -> (i32, i32) {
    %c0_i32 = arith.constant 0 : i32
    %c0_i32_0 = arith.constant 0 : i32
    %c0_i32_1 = arith.constant 0 : i32
    return %c0_i32, %c0_i32_0 : i32, i32
  }
  func.func @transform_8(%arg0: i32) -> (i32, i32) {
    %c0_i32 = arith.constant 0 : i32
    %c0_i32_0 = arith.constant 0 : i32
    %c0_i32_1 = arith.constant 0 : i32
    return %c0_i32, %c0_i32_0 : i32, i32
  }
  func.func @transform_9(%arg0: i32) -> (i32, i32, i32) {
    %c0_i32 = arith.constant 0 : i32
    %c0_i32_0 = arith.constant 0 : i32
    %c0_i32_1 = arith.constant 0 : i32
    return %arg0, %c0_i32, %c0_i32_0 : i32, i32, i32
  }
  func.func @transform_10(%arg0: i32) -> (i32, i32, i32) {
    %c0_i32 = arith.constant 0 : i32
    %c0_i32_0 = arith.constant 0 : i32
    %c0_i32_1 = arith.constant 0 : i32
    return %arg0, %c0_i32, %c0_i32_0 : i32, i32, i32
  }
}

</mosaic_0001>

<llo_original>
// kernel: tpu_custom_call.1
$region0: #{tpu_custom_call.1}
  #allocation0 [shape = 'u32[]', space=smem, size = 0x4, offset = 0x4, fixed_abs, tag = 'smem constant byte address 0x4 - core index']
  #allocation1 [shape = 'u32[144,128]{1,0:T(1,128)}', space=vmem, size = 0x12000, scoped, tag = 'internal scratch']
  %s0 = inlined_call_operand.vmem [shape: f32[2,4,128], index: 0, kind: input, shape index: {}]
  %s1 = inlined_call_operand.vmem [shape: f32[16,4], index: 1, kind: input, shape index: {}]
  %s2 = inlined_call_operand.vmem [shape: f32[8,16], index: 2, kind: input, shape index: {}]
  %s3 = inlined_call_operand.vmem [shape: f32[16,8], index: 3, kind: input, shape index: {}]
  %s4 = inlined_call_operand.vmem [shape: f32[16,1], index: 4, kind: input, shape index: {}]
  %s5 = inlined_call_operand.vmem [shape: f32[32,16], index: 5, kind: input, shape index: {}]
  %s6 = inlined_call_operand.vmem [shape: f32[8,32], index: 6, kind: input, shape index: {}]
  %s7 = inlined_call_operand.vmem [shape: f32[32,8], index: 7, kind: input, shape index: {}]
  %s8 = inlined_call_operand.vmem [shape: f32[32,1], index: 8, kind: input, shape index: {}]
  %s9 = inlined_call_operand.vmem [shape: f32[2,32,16], index: 9, kind: output, shape index: {0}]
  %s10 = inlined_call_operand.vmem [shape: f32[2,32,16], index: 10, kind: output, shape index: {1}]
  %11 = xla_tuple %s9, %s10
  %s12 = sld [smem:[#allocation0]]
  $region77: #{tpu_custom_call.1} parent=0
    _
  %s14 = ssub.s32 1, %s12
  %s15 = scalar_select 0, %s14, %s12
  loop: start=0, step=1, limit=4
  $region2: #{tpu_custom_call.1} parent=0 // loop_pre_header
    _
  $region3: #{tpu_custom_call.1} parent=0 // loop_header
    %s17 = sphi 0, %s21
    %p18 = scmp.ge.s32.totalorder %s17, 4
    %s27 = sphi 0, %s29
    %s30 = sphi 0, %s27
    %s31 = sphi 0, %s30
    %s47 = sphi 0, %s31
    %s51 = sphi 0, %s51
    %s53 = sphi 0, %s51
    %s54 = sphi 0, %s53
    %s68 = sphi 0, %s54
    %s72 = sphi 0, %s72
    %s74 = sphi 0, %s72
    %s75 = sphi 0, %s74
    %s89 = sphi 0, %s75
    %s93 = sphi 0, %s93
    %s95 = sphi 0, %s93
    %s96 = sphi 0, %s95
    %s110 = sphi 0, %s96
    %s114 = sphi 0, %s114
    %s116 = sphi 0, %s114
    %s117 = sphi 0, %s116
    %s131 = sphi 0, %s117
    %s135 = sphi 0, %s135
    %s137 = sphi 0, %s135
    %s138 = sphi 0, %s137
    %s152 = sphi 0, %s138
    %s156 = sphi 0, %s156
    %s158 = sphi 0, %s156
    %s159 = sphi 0, %s158
    %s173 = sphi 0, %s159
    %s177 = sphi 0, %s177
    %s179 = sphi 0, %s177
    %s180 = sphi 0, %s179
    %s194 = sphi 0, %s180
    %s198 = sphi 0, %s198
    %s200 = sphi 0, %s198
    %s201 = sphi 0, %s200
    %s215 = sphi 0, %s201
    %s221 = sphi 0, %s223
    %s224 = sphi 0, %s221
    %s225 = sphi 0, %s224
    %s241 = sphi 0, %s225
    %s247 = sphi 0, %s249
    %s250 = sphi 0, %s247
    %s251 = sphi 0, %s250
    %s267 = sphi 0, %s251
  $region4: #{tpu_custom_call.1} parent=0 // loop_header_branch
    %20 = sbr.rel (%p18) target = $region8
  $region5: #{tpu_custom_call.1} parent=0 // loop_body
    %s22 = ssub.s32 %s17, 1
    %s23 = ssub.s32 %s17, 2
    %s24 = sadd.s32 %s17, 1
    %s25 = ssub.s32 %s17, %s24
    %p26 = scmp.eq.s32.totalorder %s25, 0
    %s28 = sadd.s32 %s27, 1
    %s29 = scalar_select %p26, %s27, %s28
    %p32 = pneg %p26
    %p33 = scmp.eq.s32.totalorder %s17, 1
    %p34 = por %p32, %p33
    %p35 = scmp.ne.s32.totalorder %s27, %s30
    %p36 = scmp.eq.s32.totalorder %s17, 0
    %p37 = por %p35, %p36
    %p38 = scmp.ne.s32.totalorder %s27, %s30
    %p39 = scmp.eq.s32.totalorder %s22, 1
    %p40 = por %p38, %p39
    %p41 = scmp.ne.s32.totalorder %s30, %s31
    %p42 = scmp.eq.s32.totalorder %s22, 0
    %p43 = por %p41, %p42
    %p44 = scmp.ne.s32.totalorder %s30, %s31
    %p45 = scmp.eq.s32.totalorder %s23, 1
    %p46 = por %p44, %p45
    %p48 = scmp.ne.s32.totalorder %s31, %s47
    %p49 = scmp.eq.s32.totalorder %s23, 0
    %p50 = por %p48, %p49
    %s52 = sadd.s32 %s51, 1
    %p55 = scmp.eq.s32.totalorder %s17, 1
    %p56 = scmp.ne.s32.totalorder %s51, %s53
    %p57 = scmp.eq.s32.totalorder %s17, 0
    %p58 = por %p56, %p57
    %p59 = scmp.ne.s32.totalorder %s51, %s53
    %p60 = scmp.eq.s32.totalorder %s22, 1
    %p61 = por %p59, %p60
    %p62 = scmp.ne.s32.totalorder %s53, %s54
    %p63 = scmp.eq.s32.totalorder %s22, 0
    %p64 = por %p62, %p63
    %p65 = scmp.ne.s32.totalorder %s53, %s54
    %p66 = scmp.eq.s32.totalorder %s23, 1
    %p67 = por %p65, %p66
    %p69 = scmp.ne.s32.totalorder %s54, %s68
    %p70 = scmp.eq.s32.totalorder %s23, 0
    %p71 = por %p69, %p70
    %s73 = sadd.s32 %s72, 1
    %p76 = scmp.eq.s32.totalorder %s17, 1
    %p77 = scmp.ne.s32.totalorder %s72, %s74
    %p78 = scmp.eq.s32.totalorder %s17, 0
    %p79 = por %p77, %p78
    %p80 = scmp.ne.s32.totalorder %s72, %s74
    %p81 = scmp.eq.s32.totalorder %s22, 1
    %p82 = por %p80, %p81
    %p83 = scmp.ne.s32.totalorder %s74, %s75
    %p84 = scmp.eq.s32.totalorder %s22, 0
    %p85 = por %p83, %p84
    %p86 = scmp.ne.s32.totalorder %s74, %s75
    %p87 = scmp.eq.s32.totalorder %s23, 1
    %p88 = por %p86, %p87
    %p90 = scmp.ne.s32.totalorder %s75, %s89
    %p91 = scmp.eq.s32.totalorder %s23, 0
    %p92 = por %p90, %p91
    %s94 = sadd.s32 %s93, 1
    %p97 = scmp.eq.s32.totalorder %s17, 1
    %p98 = scmp.ne.s32.totalorder %s93, %s95
    %p99 = scmp.eq.s32.totalorder %s17, 0
    %p100 = por %p98, %p99
    %p101 = scmp.ne.s32.totalorder %s93, %s95
    %p102 = scmp.eq.s32.totalorder %s22, 1
    %p103 = por %p101, %p102
    %p104 = scmp.ne.s32.totalorder %s95, %s96
    %p105 = scmp.eq.s32.totalorder %s22, 0
    %p106 = por %p104, %p105
    %p107 = scmp.ne.s32.totalorder %s95, %s96
    %p108 = scmp.eq.s32.totalorder %s23, 1
    %p109 = por %p107, %p108
    %p111 = scmp.ne.s32.totalorder %s96, %s110
    %p112 = scmp.eq.s32.totalorder %s23, 0
    %p113 = por %p111, %p112
    %s115 = sadd.s32 %s114, 1
    %p118 = scmp.eq.s32.totalorder %s17, 1
    %p119 = scmp.ne.s32.totalorder %s114, %s116
    %p120 = scmp.eq.s32.totalorder %s17, 0
    %p121 = por %p119, %p120
    %p122 = scmp.ne.s32.totalorder %s114, %s116
    %p123 = scmp.eq.s32.totalorder %s22, 1
    %p124 = por %p122, %p123
    %p125 = scmp.ne.s32.totalorder %s116, %s117
    %p126 = scmp.eq.s32.totalorder %s22, 0
    %p127 = por %p125, %p126
    %p128 = scmp.ne.s32.totalorder %s116, %s117
    %p129 = scmp.eq.s32.totalorder %s23, 1
    %p130 = por %p128, %p129
    %p132 = scmp.ne.s32.totalorder %s117, %s131
    %p133 = scmp.eq.s32.totalorder %s23, 0
    %p134 = por %p132, %p133
    %s136 = sadd.s32 %s135, 1
    %p139 = scmp.eq.s32.totalorder %s17, 1
    %p140 = scmp.ne.s32.totalorder %s135, %s137
    %p141 = scmp.eq.s32.totalorder %s17, 0
    %p142 = por %p140, %p141
    %p143 = scmp.ne.s32.totalorder %s135, %s137
    %p144 = scmp.eq.s32.totalorder %s22, 1
    %p145 = por %p143, %p144
    %p146 = scmp.ne.s32.totalorder %s137, %s138
    %p147 = scmp.eq.s32.totalorder %s22, 0
    %p148 = por %p146, %p147
    %p149 = scmp.ne.s32.totalorder %s137, %s138
    %p150 = scmp.eq.s32.totalorder %s23, 1
    %p151 = por %p149, %p150
    %p153 = scmp.ne.s32.totalorder %s138, %s152
    %p154 = scmp.eq.s32.totalorder %s23, 0
    %p155 = por %p153, %p154
    %s157 = sadd.s32 %s156, 1
    %p160 = scmp.eq.s32.totalorder %s17, 1
    %p161 = scmp.ne.s32.totalorder %s156, %s158
    %p162 = scmp.eq.s32.totalorder %s17, 0
    %p163 = por %p161, %p162
    %p164 = scmp.ne.s32.totalorder %s156, %s158
    %p165 = scmp.eq.s32.totalorder %s22, 1
    %p166 = por %p164, %p165
    %p167 = scmp.ne.s32.totalorder %s158, %s159
    %p168 = scmp.eq.s32.totalorder %s22, 0
    %p169 = por %p167, %p168
    %p170 = scmp.ne.s32.totalorder %s158, %s159
    %p171 = scmp.eq.s32.totalorder %s23, 1
    %p172 = por %p170, %p171
    %p174 = scmp.ne.s32.totalorder %s159, %s173
    %p175 = scmp.eq.s32.totalorder %s23, 0
    %p176 = por %p174, %p175
    %s178 = sadd.s32 %s177, 1
    %p181 = scmp.eq.s32.totalorder %s17, 1
    %p182 = scmp.ne.s32.totalorder %s177, %s179
    %p183 = scmp.eq.s32.totalorder %s17, 0
    %p184 = por %p182, %p183
    %p185 = scmp.ne.s32.totalorder %s177, %s179
    %p186 = scmp.eq.s32.totalorder %s22, 1
    %p187 = por %p185, %p186
    %p188 = scmp.ne.s32.totalorder %s179, %s180
    %p189 = scmp.eq.s32.totalorder %s22, 0
    %p190 = por %p188, %p189
    %p191 = scmp.ne.s32.totalorder %s179, %s180
    %p192 = scmp.eq.s32.totalorder %s23, 1
    %p193 = por %p191, %p192
    %p195 = scmp.ne.s32.totalorder %s180, %s194
    %p196 = scmp.eq.s32.totalorder %s23, 0
    %p197 = por %p195, %p196
    %s199 = sadd.s32 %s198, 1
    %p202 = scmp.eq.s32.totalorder %s17, 1
    %p203 = scmp.ne.s32.totalorder %s198, %s200
    %p204 = scmp.eq.s32.totalorder %s17, 0
    %p205 = por %p203, %p204
    %p206 = scmp.ne.s32.totalorder %s198, %s200
    %p207 = scmp.eq.s32.totalorder %s22, 1
    %p208 = por %p206, %p207
    %p209 = scmp.ne.s32.totalorder %s200, %s201
    %p210 = scmp.eq.s32.totalorder %s22, 0
    %p211 = por %p209, %p210
    %p212 = scmp.ne.s32.totalorder %s200, %s201
    %p213 = scmp.eq.s32.totalorder %s23, 1
    %p214 = por %p212, %p213
    %p216 = scmp.ne.s32.totalorder %s201, %s215
    %p217 = scmp.eq.s32.totalorder %s23, 0
    %p218 = por %p216, %p217
    %s219 = ssub.s32 %s17, %s24
    %p220 = scmp.eq.s32.totalorder %s219, 0
    %s222 = sadd.s32 %s221, 1
    %s223 = scalar_select %p220, %s221, %s222
    %p226 = pneg %p220
    %p227 = scmp.eq.s32.totalorder %s17, 1
    %p228 = por %p226, %p227
    %p229 = scmp.ne.s32.totalorder %s221, %s224
    %p230 = scmp.eq.s32.totalorder %s17, 0
    %p231 = por %p229, %p230
    %p232 = scmp.ne.s32.totalorder %s221, %s224
    %p233 = scmp.eq.s32.totalorder %s22, 1
    %p234 = por %p232, %p233
    %p235 = scmp.ne.s32.totalorder %s224, %s225
    %p236 = scmp.eq.s32.totalorder %s22, 0
    %p237 = por %p235, %p236
    %p238 = scmp.ne.s32.totalorder %s224, %s225
    %p239 = scmp.eq.s32.totalorder %s23, 1
    %p240 = por %p238, %p239
    %p242 = scmp.ne.s32.totalorder %s225, %s241
    %p243 = scmp.eq.s32.totalorder %s23, 0
    %p244 = por %p242, %p243
    %s245 = ssub.s32 %s17, %s24
    %p246 = scmp.eq.s32.totalorder %s245, 0
    %s248 = sadd.s32 %s247, 1
    %s249 = scalar_select %p246, %s247, %s248
    %p252 = pneg %p246
    %p253 = scmp.eq.s32.totalorder %s17, 1
    %p254 = por %p252, %p253
    %p255 = scmp.ne.s32.totalorder %s247, %s250
    %p256 = scmp.eq.s32.totalorder %s17, 0
    %p257 = por %p255, %p256
    %p258 = scmp.ne.s32.totalorder %s247, %s250
    %p259 = scmp.eq.s32.totalorder %s22, 1
    %p260 = por %p258, %p259
    %p261 = scmp.ne.s32.totalorder %s250, %s251
    %p262 = scmp.eq.s32.totalorder %s22, 0
    %p263 = por %p261, %p262
    %p264 = scmp.ne.s32.totalorder %s250, %s251
    %p265 = scmp.eq.s32.totalorder %s23, 1
    %p266 = por %p264, %p265
    %p268 = scmp.ne.s32.totalorder %s251, %s267
    %p269 = scmp.eq.s32.totalorder %s23, 0
    %p270 = por %p268, %p269
    %p271 = scmp.le.s32.totalorder 1, %s17
    %p272 = scmp.lt.s32.totalorder %s17, 3
    %p273 = pnand %p271, %p272
    %p274 = pneg %p273
    // Predicated region
    $region9: #{tpu_custom_call.1} parent=5 // pred_check
      _
    $region10: #{tpu_custom_call.1} parent=5 // pred_check_branch
      %276 = sbr.rel (%p273) target = $region12
    $region11: #{tpu_custom_call.1} parent=5 // pred_region
      %s277 = ssub.s32 %s17, 1
      // Predicated region
      $region13: #{tpu_custom_call.1} parent=11 // pred_check
        %p278 = pneg %p64
      $region14: #{tpu_custom_call.1} parent=11 // pred_check_branch
        %280 = sbr.rel (%p278) target = $region16
      $region15: #{tpu_custom_call.1} parent=11 // pred_region
        _
      $region16: #{tpu_custom_call.1} parent=11 // pred_fallthru
        _
      // Predicated region
      $region17: #{tpu_custom_call.1} parent=11 // pred_check
        %p281 = pneg %p85
      $region18: #{tpu_custom_call.1} parent=11 // pred_check_branch
        %283 = sbr.rel (%p281) target = $region20
      $region19: #{tpu_custom_call.1} parent=11 // pred_region
        _
      $region20: #{tpu_custom_call.1} parent=11 // pred_fallthru
        _
      // Predicated region
      $region21: #{tpu_custom_call.1} parent=11 // pred_check
        %p284 = pneg %p106
      $region22: #{tpu_custom_call.1} parent=11 // pred_check_branch
        %286 = sbr.rel (%p284) target = $region24
      $region23: #{tpu_custom_call.1} parent=11 // pred_region
        _
      $region24: #{tpu_custom_call.1} parent=11 // pred_fallthru
        _
      // Predicated region
      $region25: #{tpu_custom_call.1} parent=11 // pred_check
        %p287 = pneg %p127
      $region26: #{tpu_custom_call.1} parent=11 // pred_check_branch
        %289 = sbr.rel (%p287) target = $region28
      $region27: #{tpu_custom_call.1} parent=11 // pred_region
        _
      $region28: #{tpu_custom_call.1} parent=11 // pred_fallthru
        _
      // Predicated region
      $region29: #{tpu_custom_call.1} parent=11 // pred_check
        %p290 = pneg %p148
      $region30: #{tpu_custom_call.1} parent=11 // pred_check_branch
        %292 = sbr.rel (%p290) target = $region32
      $region31: #{tpu_custom_call.1} parent=11 // pred_region
        _
      $region32: #{tpu_custom_call.1} parent=11 // pred_fallthru
        _
      // Predicated region
      $region33: #{tpu_custom_call.1} parent=11 // pred_check
        %p293 = pneg %p169
      $region34: #{tpu_custom_call.1} parent=11 // pred_check_branch
        %295 = sbr.rel (%p293) target = $region36
      $region35: #{tpu_custom_call.1} parent=11 // pred_region
        _
      $region36: #{tpu_custom_call.1} parent=11 // pred_fallthru
        _
      // Predicated region
      $region37: #{tpu_custom_call.1} parent=11 // pred_check
        %p296 = pneg %p190
      $region38: #{tpu_custom_call.1} parent=11 // pred_check_branch
        %298 = sbr.rel (%p296) target = $region40
      $region39: #{tpu_custom_call.1} parent=11 // pred_region
        _
      $region40: #{tpu_custom_call.1} parent=11 // pred_fallthru
        _
      // Predicated region
      $region41: #{tpu_custom_call.1} parent=11 // pred_check
        %p299 = pneg %p211
      $region42: #{tpu_custom_call.1} parent=11 // pred_check_branch
        %301 = sbr.rel (%p299) target = $region44
      $region43: #{tpu_custom_call.1} parent=11 // pred_region
        _
      $region44: #{tpu_custom_call.1} parent=11 // pred_fallthru
        _
    $region12: #{tpu_custom_call.1} parent=5 // pred_fallthru
      _
    %p302 = scmp.lt.s32.totalorder %s17, 2
    // Predicated region
    $region45: #{tpu_custom_call.1} parent=5 // pred_check
      %p303 = pneg %p302
    $region46: #{tpu_custom_call.1} parent=5 // pred_check_branch
      %305 = sbr.rel (%p303) target = $region48
    $region47: #{tpu_custom_call.1} parent=5 // pred_region
      // Predicated region
      $region49: #{tpu_custom_call.1} parent=47 // pred_check
        %p306 = pneg %p37
      $region50: #{tpu_custom_call.1} parent=47 // pred_check_branch
        %308 = sbr.rel (%p306) target = $region52
      $region51: #{tpu_custom_call.1} parent=47 // pred_region
        %p309 = scmp.lt.s32.totalorder %s17, 1
        %s310 = scalar_select %p309, %s17, 1
        %s311 = smul.addr %s310, 4
        %s312 = scalar_lea.vmem %s0, %s311
      $region52: #{tpu_custom_call.1} parent=47 // pred_fallthru
        _
    $region48: #{tpu_custom_call.1} parent=5 // pred_fallthru
      _
    %p313 = scmp.le.s32.totalorder 1, %s17
    %p314 = scmp.lt.s32.totalorder %s17, 3
    %p315 = pnand %p313, %p314
    %p316 = pneg %p315
    // Predicated region
    $region53: #{tpu_custom_call.1} parent=5 // pred_check
      _
    $region54: #{tpu_custom_call.1} parent=5 // pred_check_branch
      %318 = sbr.rel (%p315) target = $region56
    $region55: #{tpu_custom_call.1} parent=5 // pred_region
      %s319 = ssub.s32 %s17, 1
      %p320 = scmp.lt.s32.totalorder %s22, 1
      %s321 = scalar_select %p320, %s22, 1
      %s322 = smul.addr %s321, 4
      %s323 = scalar_lea.vmem %s0, %s322
      %p324 = pneg %p43
      %p325 = pneg %p40
      %p326 = pneg %p64
      %p327 = pneg %p61
      %p328 = pneg %p85
      %p329 = pneg %p82
      %p330 = pneg %p106
      %p331 = pneg %p103
      %p332 = pneg %p127
      %p333 = pneg %p124
      %p334 = pneg %p148
      %p335 = pneg %p145
      %p336 = pneg %p169
      %p337 = pneg %p166
      %p338 = pneg %p190
      %p339 = pneg %p187
      %p340 = pneg %p211
      %p341 = pneg %p208
      %p342 = pneg %p237
      %p343 = pneg %p234
      %p344 = scmp.lt.s32.totalorder %s22, 1
      %s345 = scalar_select %p344, %s22, 1
      %s346 = smul.addr %s345, 4
      %s347 = smul.addr %s346, 8
      %s348 = scalar_lea.vmem %s9, %s347
      %p349 = pneg %p263
      %p350 = pneg %p260
      %p351 = scmp.lt.s32.totalorder %s22, 1
      %s352 = scalar_select %p351, %s22, 1
      %s353 = smul.addr %s352, 4
      %s354 = smul.addr %s353, 8
      %s355 = scalar_lea.vmem %s10, %s354
      %p356 = scmp.lt.s32.totalorder %s22, 1
      %s357 = scalar_select %p356, %s22, 1
      %s358 = smul.addr %s357, 4
      %s359 = scalar_lea.vmem %s0, %s358
      %p360 = scmp.lt.s32.totalorder %s22, 1
      %s361 = scalar_select %p360, %s22, 1
      %s362 = smul.addr %s361, 4
      %s363 = smul.addr %s362, 8
      %s364 = scalar_lea.vmem %s9, %s363
      %p365 = scmp.lt.s32.totalorder %s22, 1
      %s366 = scalar_select %p365, %s22, 1
      %s367 = smul.addr %s366, 4
      %s368 = smul.addr %s367, 8
      %s369 = scalar_lea.vmem %s10, %s368
      %v370 = vld [vmem:[%s359] sm:$0xf]
      %v371 = vld [vmem:[%s1] sm:$0xff]
      %v372 = vld [vmem:[%s1 + $0x8] sm:$0xff]
      %v373 = vld [vmem:[%s2] sm:$0xff]
      %v374 = vld [vmem:[%s3] sm:$0xff]
      %v375 = vld [vmem:[%s3 + $0x8] sm:$0xff]
      %v376 = vld [vmem:[%s4] sm:$0xff]
      %v377 = vld [vmem:[%s4 + $0x8] sm:$0xff]
      %vm378 = vcmask 31744
      %v380 = vsel %vm378, %v371, 0
      %v383 = vsel %vm378, %v372, 0
      %vm385 = vcmask 1043456
      %v387 = vsel %vm385, %v370, 0
      %389 = vmatprep.subr.mxu0 0.0
      %390 = vmatpush1.msra.mxu0 %v387
      %391 = vmatprep.subr.mxu0 0.0
      %392 = vmatpush1.msra.mxu0 0.0
      %393 = vmatprep.subr.mxu0 0.0
      %394 = vmatpush1.msra.mxu0 0.0
      %395 = vmatprep.subr.mxu0 0.0
      %396 = vmatpush1.msra.mxu0 0.0
      %397 = vmatprep.subr.mxu0 0.0
      %398 = vmatpush1.msra.mxu0 0.0
      %399 = vmatprep.subr.mxu0 0.0
      %400 = vmatpush1.msra.mxu0 0.0
      %401 = vmatprep.subr.mxu0 0.0
      %402 = vmatpush1.msra.mxu0 0.0
      %403 = vmatprep.subr.mxu0 0.0
      %404 = vmatpush1.msra.mxu0 0.0
      %405 = vmatprep.subr.mxu0 0.0
      %406 = vmatpush1.msra.mxu0 0.0
      %407 = vmatprep.subr.mxu0 0.0
      %408 = vmatpush1.msra.mxu0 0.0
      %409 = vmatprep.subr.mxu0 0.0
      %410 = vmatpush1.msra.mxu0 0.0
      %411 = vmatprep.subr.mxu0 0.0
      %412 = vmatpush1.msra.mxu0 0.0
      %413 = vmatprep.subr.mxu0 0.0
      %414 = vmatpush1.msra.mxu0 0.0
      %415 = vmatprep.subr.mxu0 0.0
      %416 = vmatpush1.msra.mxu0 0.0
      %417 = vmatprep.subr.mxu0 0.0
      %418 = vmatpush1.msra.mxu0 0.0
      %419 = vmatprep.subr.mxu0 0.0
      %420 = vmatpush1.msra.mxu0 0.0
      %421 = vmatprep.subr.mxu0 0.0
      %422 = vmatpush1.msra.mxu0 0.0
      %423 = vmatprep.subr.mxu0 0.0
      %424 = vmatpush1.msra.mxu0 0.0
      %425 = vmatprep.subr.mxu0 0.0
      %426 = vmatpush1.msra.mxu0 0.0
      %427 = vmatprep.subr.mxu0 0.0
      %428 = vmatpush1.msra.mxu0 0.0
      %429 = vmatprep.subr.mxu0 0.0
      %430 = vmatpush1.msra.mxu0 0.0
      %431 = vmatprep.subr.mxu0 0.0
      %432 = vmatpush1.msra.mxu0 0.0
      %433 = vmatprep.subr.mxu0 0.0
      %434 = vmatpush1.msra.mxu0 0.0
      %435 = vmatprep.subr.mxu0 0.0
      %436 = vmatpush1.msra.mxu0 0.0
      %437 = vmatprep.subr.mxu0 0.0
      %438 = vmatpush1.msra.mxu0 0.0
      %439 = vmatprep.subr.mxu0 0.0
      %440 = vmatpush1.msra.mxu0 0.0
      %441 = vmatprep.subr.mxu0 0.0
      %442 = vmatpush1.msra.mxu0 0.0
      %443 = vmatprep.subr.mxu0 0.0
      %444 = vmatpush1.msra.mxu0 0.0
      %445 = vmatprep.subr.mxu0 0.0
      %446 = vmatpush1.msra.mxu0 0.0
      %447 = vmatprep.subr.mxu0 0.0
      %448 = vmatpush1.msra.mxu0 0.0
      %449 = vmatprep.subr.mxu0 0.0
      %450 = vmatpush1.msra.mxu0 0.0
      %451 = vmatprep.subr.mxu0 0.0
      %452 = vmatpush1.msra.mxu0 0.0
      %453 = vmatprep.mubr.f32.mxu0 0.0
      %454 = vmatmul.mubr.f32.gmra.mrb[0].mxu0 %v380
      %v455 = vpop.f32.mrb[0].mxu0
      %v456 = vadd.f32 0.0, %v455
      %v457 = vpop.f32.mrb[0].mxu0
      %458 = vmatprep.mubr.f32.mxu0 0.0
      %459 = vmatmul.mubr.f32.gmra.mrb[0].mxu0 %v383
      %v460 = vpop.f32.mrb[0].mxu0
      %v461 = vadd.f32 0.0, %v460
      %v462 = vpop.f32.mrb[0].mxu0
      %463 = vdwg.mxu0
      %464 = vadd.xlane.f32.xlu0 %v456
      %v465 = vpop.xlane.xlu0 %464
      %466 = vadd.xlane.f32.xlu0 %v461
      %v467 = vpop.xlane.xlu0 %466
      %v468 = vmul.f32 %v456, %v456
      %v469 = vmul.f32 %v461, %v461
      %470 = vadd.xlane.f32.xlu0 %v468
      %v471 = vpop.xlane.xlu0 %470
      %472 = vadd.xlane.f32.xlu0 %v469
      %v473 = vpop.xlane.xlu0 %472
      %vm474 = vcmask 130048
      %v476 = vsel %vm474, %v373, 0
      %478 = vmatprep.subr.mxu0 0.0
      %479 = vmatpush1.msra.mxu0 %v465
      %480 = vmatprep.subr.mxu0 0.0
      %481 = vmatpush1.msra.mxu0 %v467
      %482 = vmatprep.subr.mxu0 0.0
      %483 = vmatpush1.msra.mxu0 0.0
      %484 = vmatprep.subr.mxu0 0.0
      %485 = vmatpush1.msra.mxu0 0.0
      %486 = vmatprep.subr.mxu0 0.0
      %487 = vmatpush1.msra.mxu0 0.0
      %488 = vmatprep.subr.mxu0 0.0
      %489 = vmatpush1.msra.mxu0 0.0
      %490 = vmatprep.subr.mxu0 0.0
      %491 = vmatpush1.msra.mxu0 0.0
      %492 = vmatprep.subr.mxu0 0.0
      %493 = vmatpush1.msra.mxu0 0.0
      %494 = vmatprep.subr.mxu0 0.0
      %495 = vmatpush1.msra.mxu0 0.0
      %496 = vmatprep.subr.mxu0 0.0
      %497 = vmatpush1.msra.mxu0 0.0
      %498 = vmatprep.subr.mxu0 0.0
      %499 = vmatpush1.msra.mxu0 0.0
      %500 = vmatprep.subr.mxu0 0.0
      %501 = vmatpush1.msra.mxu0 0.0
      %502 = vmatprep.subr.mxu0 0.0
      %503 = vmatpush1.msra.mxu0 0.0
      %504 = vmatprep.subr.mxu0 0.0
      %505 = vmatpush1.msra.mxu0 0.0
      %506 = vmatprep.subr.mxu0 0.0
      %507 = vmatpush1.msra.mxu0 0.0
      %508 = vmatprep.subr.mxu0 0.0
      %509 = vmatpush1.msra.mxu0 0.0
      %510 = vmatprep.subr.mxu0 0.0
      %511 = vmatpush1.msra.mxu0 0.0
      %512 = vmatprep.subr.mxu0 0.0
      %513 = vmatpush1.msra.mxu0 0.0
      %514 = vmatprep.subr.mxu0 0.0
      %515 = vmatpush1.msra.mxu0 0.0
      %516 = vmatprep.subr.mxu0 0.0
      %517 = vmatpush1.msra.mxu0 0.0
      %518 = vmatprep.subr.mxu0 0.0
      %519 = vmatpush1.msra.mxu0 0.0
      %520 = vmatprep.subr.mxu0 0.0
      %521 = vmatpush1.msra.mxu0 0.0
      %522 = vmatprep.subr.mxu0 0.0
      %523 = vmatpush1.msra.mxu0 0.0
      %524 = vmatprep.subr.mxu0 0.0
      %525 = vmatpush1.msra.mxu0 0.0
      %526 = vmatprep.subr.mxu0 0.0
      %527 = vmatpush1.msra.mxu0 0.0
      %528 = vmatprep.subr.mxu0 0.0
      %529 = vmatpush1.msra.mxu0 0.0
      %530 = vmatprep.subr.mxu0 0.0
      %531 = vmatpush1.msra.mxu0 0.0
      %532 = vmatprep.subr.mxu0 0.0
      %533 = vmatpush1.msra.mxu0 0.0
      %534 = vmatprep.subr.mxu0 0.0
      %535 = vmatpush1.msra.mxu0 0.0
      %536 = vmatprep.subr.mxu0 0.0
      %537 = vmatpush1.msra.mxu0 0.0
      %538 = vmatprep.subr.mxu0 0.0
      %539 = vmatpush1.msra.mxu0 0.0
      %540 = vmatprep.subr.mxu0 0.0
      %541 = vmatpush1.msra.mxu0 0.0
      %542 = vmatprep.mubr.f32.mxu0 0.0
      %543 = vmatmul.mubr.f32.gmra.mrb[0].mxu0 %v476
      %v544 = vpop.f32.mrb[0].mxu0
      %v545 = vadd.f32 0.0, %v544
      %v546 = vpop.f32.mrb[0].mxu0
      %547 = vdwg.mxu0
      %548 = vmatprep.subr.mxu0 0.0
      %549 = vmatpush1.msra.mxu0 %v471
      %550 = vmatprep.subr.mxu0 0.0
      %551 = vmatpush1.msra.mxu0 %v473
      %552 = vmatprep.subr.mxu0 0.0
      %553 = vmatpush1.msra.mxu0 0.0
      %554 = vmatprep.subr.mxu0 0.0
      %555 = vmatpush1.msra.mxu0 0.0
      %556 = vmatprep.subr.mxu0 0.0
      %557 = vmatpush1.msra.mxu0 0.0
      %558 = vmatprep.subr.mxu0 0.0
      %559 = vmatpush1.msra.mxu0 0.0
      %560 = vmatprep.subr.mxu0 0.0
      %561 = vmatpush1.msra.mxu0 0.0
      %562 = vmatprep.subr.mxu0 0.0
      %563 = vmatpush1.msra.mxu0 0.0
      %564 = vmatprep.subr.mxu0 0.0
      %565 = vmatpush1.msra.mxu0 0.0
      %566 = vmatprep.subr.mxu0 0.0
      %567 = vmatpush1.msra.mxu0 0.0
      %568 = vmatprep.subr.mxu0 0.0
      %569 = vmatpush1.msra.mxu0 0.0
      %570 = vmatprep.subr.mxu0 0.0
      %571 = vmatpush1.msra.mxu0 0.0
      %572 = vmatprep.subr.mxu0 0.0
      %573 = vmatpush1.msra.mxu0 0.0
      %574 = vmatprep.subr.mxu0 0.0
      %575 = vmatpush1.msra.mxu0 0.0
      %576 = vmatprep.subr.mxu0 0.0
      %577 = vmatpush1.msra.mxu0 0.0
      %578 = vmatprep.subr.mxu0 0.0
      %579 = vmatpush1.msra.mxu0 0.0
      %580 = vmatprep.subr.mxu0 0.0
      %581 = vmatpush1.msra.mxu0 0.0
      %582 = vmatprep.subr.mxu0 0.0
      %583 = vmatpush1.msra.mxu0 0.0
      %584 = vmatprep.subr.mxu0 0.0
      %585 = vmatpush1.msra.mxu0 0.0
      %586 = vmatprep.subr.mxu0 0.0
      %587 = vmatpush1.msra.mxu0 0.0
      %588 = vmatprep.subr.mxu0 0.0
      %589 = vmatpush1.msra.mxu0 0.0
      %590 = vmatprep.subr.mxu0 0.0
      %591 = vmatpush1.msra.mxu0 0.0
      %592 = vmatprep.subr.mxu0 0.0
      %593 = vmatpush1.msra.mxu0 0.0
      %594 = vmatprep.subr.mxu0 0.0
      %595 = vmatpush1.msra.mxu0 0.0
      %596 = vmatprep.subr.mxu0 0.0
      %597 = vmatpush1.msra.mxu0 0.0
      %598 = vmatprep.subr.mxu0 0.0
      %599 = vmatpush1.msra.mxu0 0.0
      %600 = vmatprep.subr.mxu0 0.0
      %601 = vmatpush1.msra.mxu0 0.0
      %602 = vmatprep.subr.mxu0 0.0
      %603 = vmatpush1.msra.mxu0 0.0
      %604 = vmatprep.subr.mxu0 0.0
      %605 = vmatpush1.msra.mxu0 0.0
      %606 = vmatprep.subr.mxu0 0.0
      %607 = vmatpush1.msra.mxu0 0.0
      %608 = vmatprep.subr.mxu0 0.0
      %609 = vmatpush1.msra.mxu0 0.0
      %610 = vmatprep.subr.mxu0 0.0
      %611 = vmatpush1.msra.mxu0 0.0
      %612 = vmatprep.mubr.f32.mxu0 0.0
      %613 = vmatmul.mubr.f32.gmra.mrb[0].mxu0 %v476
      %v614 = vpop.f32.mrb[0].mxu0
      %v615 = vadd.f32 0.0, %v614
      %v616 = vpop.f32.mrb[0].mxu0
      %617 = vdwg.mxu0
      %v618 = vmul.f32 %v545, 0.00390625
      %v619 = vmul.f32 %v615, 0.00390625
      %v620 = vmul.f32 %v618, %v618
      %v621 = vsub.f32 %v619, %v620
      %v622 = vmax.f32 %v621, 0.0
      %v623 = vadd.f32 %v622, 1e-05
      %v624 = vrsqrt.pop %v623
      %vm625 = vcmask 64512
      %v627 = vsel %vm625, %v374, 0
      %v630 = vsel %vm625, %v375, 0
      %632 = vmatprep.subr.mxu0 0.0
      %633 = vmatpush1.msra.mxu0 %v624
      %634 = vmatprep.subr.mxu0 0.0
      %635 = vmatpush1.msra.mxu0 0.0
      %636 = vmatprep.subr.mxu0 0.0
      %637 = vmatpush1.msra.mxu0 0.0
      %638 = vmatprep.subr.mxu0 0.0
      %639 = vmatpush1.msra.mxu0 0.0
      %640 = vmatprep.subr.mxu0 0.0
      %641 = vmatpush1.msra.mxu0 0.0
      %642 = vmatprep.subr.mxu0 0.0
      %643 = vmatpush1.msra.mxu0 0.0
      %644 = vmatprep.subr.mxu0 0.0
      %645 = vmatpush1.msra.mxu0 0.0
      %646 = vmatprep.subr.mxu0 0.0
      %647 = vmatpush1.msra.mxu0 0.0
      %648 = vmatprep.subr.mxu0 0.0
      %649 = vmatpush1.msra.mxu0 0.0
      %650 = vmatprep.subr.mxu0 0.0
      %651 = vmatpush1.msra.mxu0 0.0
      %652 = vmatprep.subr.mxu0 0.0
      %653 = vmatpush1.msra.mxu0 0.0
      %654 = vmatprep.subr.mxu0 0.0
      %655 = vmatpush1.msra.mxu0 0.0
      %656 = vmatprep.subr.mxu0 0.0
      %657 = vmatpush1.msra.mxu0 0.0
      %658 = vmatprep.subr.mxu0 0.0
      %659 = vmatpush1.msra.mxu0 0.0
      %660 = vmatprep.subr.mxu0 0.0
      %661 = vmatpush1.msra.mxu0 0.0
      %662 = vmatprep.subr.mxu0 0.0
      %663 = vmatpush1.msra.mxu0 0.0
      %664 = vmatprep.subr.mxu0 0.0
      %665 = vmatpush1.msra.mxu0 0.0
      %666 = vmatprep.subr.mxu0 0.0
      %667 = vmatpush1.msra.mxu0 0.0
      %668 = vmatprep.subr.mxu0 0.0
      %669 = vmatpush1.msra.mxu0 0.0
      %670 = vmatprep.subr.mxu0 0.0
      %671 = vmatpush1.msra.mxu0 0.0
      %672 = vmatprep.subr.mxu0 0.0
      %673 = vmatpush1.msra.mxu0 0.0
      %674 = vmatprep.subr.mxu0 0.0
      %675 = vmatpush1.msra.mxu0 0.0
      %676 = vmatprep.subr.mxu0 0.0
      %677 = vmatpush1.msra.mxu0 0.0
      %678 = vmatprep.subr.mxu0 0.0
      %679 = vmatpush1.msra.mxu0 0.0
      %680 = vmatprep.subr.mxu0 0.0
      %681 = vmatpush1.msra.mxu0 0.0
      %682 = vmatprep.subr.mxu0 0.0
      %683 = vmatpush1.msra.mxu0 0.0
      %684 = vmatprep.subr.mxu0 0.0
      %685 = vmatpush1.msra.mxu0 0.0
      %686 = vmatprep.subr.mxu0 0.0
      %687 = vmatpush1.msra.mxu0 0.0
      %688 = vmatprep.subr.mxu0 0.0
      %689 = vmatpush1.msra.mxu0 0.0
      %690 = vmatprep.subr.mxu0 0.0
      %691 = vmatpush1.msra.mxu0 0.0
      %692 = vmatprep.subr.mxu0 0.0
      %693 = vmatpush1.msra.mxu0 0.0
      %694 = vmatprep.subr.mxu0 0.0
      %695 = vmatpush1.msra.mxu0 0.0
      %696 = vmatprep.mubr.f32.mxu0 0.0
      %697 = vmatmul.mubr.f32.gmra.mrb[0].mxu0 %v627
      %v698 = vpop.f32.mrb[0].mxu0
      %v699 = vadd.f32 0.0, %v698
      %v700 = vpop.f32.mrb[0].mxu0
      %701 = vmatprep.mubr.f32.mxu0 0.0
      %702 = vmatmul.mubr.f32.gmra.mrb[0].mxu0 %v630
      %v703 = vpop.f32.mrb[0].mxu0
      %v704 = vadd.f32 0.0, %v703
      %v705 = vpop.f32.mrb[0].mxu0
      %706 = vdwg.mxu0
      %v707 = vmul.f32 %v618, %v624
      %708 = vmatprep.subr.mxu0 0.0
      %709 = vmatpush1.msra.mxu0 %v707
      %710 = vmatprep.subr.mxu0 0.0
      %711 = vmatpush1.msra.mxu0 0.0
      %712 = vmatprep.subr.mxu0 0.0
      %713 = vmatpush1.msra.mxu0 0.0
      %714 = vmatprep.subr.mxu0 0.0
      %715 = vmatpush1.msra.mxu0 0.0
      %716 = vmatprep.subr.mxu0 0.0
      %717 = vmatpush1.msra.mxu0 0.0
      %718 = vmatprep.subr.mxu0 0.0
      %719 = vmatpush1.msra.mxu0 0.0
      %720 = vmatprep.subr.mxu0 0.0
      %721 = vmatpush1.msra.mxu0 0.0
      %722 = vmatprep.subr.mxu0 0.0
      %723 = vmatpush1.msra.mxu0 0.0
      %724 = vmatprep.subr.mxu0 0.0
      %725 = vmatpush1.msra.mxu0 0.0
      %726 = vmatprep.subr.mxu0 0.0
      %727 = vmatpush1.msra.mxu0 0.0
      %728 = vmatprep.subr.mxu0 0.0
      %729 = vmatpush1.msra.mxu0 0.0
      %730 = vmatprep.subr.mxu0 0.0
      %731 = vmatpush1.msra.mxu0 0.0
      %732 = vmatprep.subr.mxu0 0.0
      %733 = vmatpush1.msra.mxu0 0.0
      %734 = vmatprep.subr.mxu0 0.0
      %735 = vmatpush1.msra.mxu0 0.0
      %736 = vmatprep.subr.mxu0 0.0
      %737 = vmatpush1.msra.mxu0 0.0
      %738 = vmatprep.subr.mxu0 0.0
      %739 = vmatpush1.msra.mxu0 0.0
      %740 = vmatprep.subr.mxu0 0.0
      %741 = vmatpush1.msra.mxu0 0.0
      %742 = vmatprep.subr.mxu0 0.0
      %743 = vmatpush1.msra.mxu0 0.0
      %744 = vmatprep.subr.mxu0 0.0
      %745 = vmatpush1.msra.mxu0 0.0
      %746 = vmatprep.subr.mxu0 0.0
      %747 = vmatpush1.msra.mxu0 0.0
      %748 = vmatprep.subr.mxu0 0.0
      %749 = vmatpush1.msra.mxu0 0.0
      %750 = vmatprep.subr.mxu0 0.0
      %751 = vmatpush1.msra.mxu0 0.0
      %752 = vmatprep.subr.mxu0 0.0
      %753 = vmatpush1.msra.mxu0 0.0
      %754 = vmatprep.subr.mxu0 0.0
      %755 = vmatpush1.msra.mxu0 0.0
      %756 = vmatprep.subr.mxu0 0.0
      %757 = vmatpush1.msra.mxu0 0.0
      %758 = vmatprep.subr.mxu0 0.0
      %759 = vmatpush1.msra.mxu0 0.0
      %760 = vmatprep.subr.mxu0 0.0
      %761 = vmatpush1.msra.mxu0 0.0
      %762 = vmatprep.subr.mxu0 0.0
      %763 = vmatpush1.msra.mxu0 0.0
      %764 = vmatprep.subr.mxu0 0.0
      %765 = vmatpush1.msra.mxu0 0.0
      %766 = vmatprep.subr.mxu0 0.0
      %767 = vmatpush1.msra.mxu0 0.0
      %768 = vmatprep.subr.mxu0 0.0
      %769 = vmatpush1.msra.mxu0 0.0
      %770 = vmatprep.subr.mxu0 0.0
      %771 = vmatpush1.msra.mxu0 0.0
      %772 = vmatprep.mubr.f32.mxu0 0.0
      %773 = vmatmul.mubr.f32.gmra.mrb[0].mxu0 %v627
      %v774 = vpop.f32.mrb[0].mxu0
      %v775 = vadd.f32 0.0, %v774
      %v776 = vpop.f32.mrb[0].mxu0
      %777 = vmatprep.mubr.f32.mxu0 0.0
      %778 = vmatmul.mubr.f32.gmra.mrb[0].mxu0 %v630
      %v779 = vpop.f32.mrb[0].mxu0
      %v780 = vadd.f32 0.0, %v779
      %v781 = vpop.f32.mrb[0].mxu0
      %782 = vdwg.mxu0
      %v783 = vsub.f32 %v376, %v775
      %v784 = vsub.f32 %v377, %v780
      %786 = vset.pattern.permute.xlu0 0
      %787 = vperm.xlu0 %786, %v699
      %v788 = vpop.permute.xlu0 %787
      %791 = vset.pattern.permute.xlu0 0
      %792 = vperm.xlu0 %791, %v704
      %v793 = vpop.permute.xlu0 %792
      %v795 = vmul.f32 %v456, %v788
      %v796 = vmul.f32 %v461, %v793
      %798 = vset.pattern.permute.xlu0 0
      %799 = vperm.xlu0 %798, %v783
      %v800 = vpop.permute.xlu0 %799
      %803 = vset.pattern.permute.xlu0 0
      %804 = vperm.xlu0 %803, %v784
      %v805 = vpop.permute.xlu0 %804
      %v807 = vadd.f32 %v795, %v800
      %v808 = vadd.f32 %v796, %v805
      %v809 = vmax.f32 %v807, 0.0
      %v810 = vmax.f32 %v808, 0.0
      %v811 = vld [vmem:[%s5] sm:$0xff]
      %v812 = vld [vmem:[%s5 + $0x8] sm:$0xff]
      %v813 = vld [vmem:[%s5 + $0x10] sm:$0xff]
      %v814 = vld [vmem:[%s5 + $0x18] sm:$0xff]
      %v815 = vld [vmem:[%s6] sm:$0xff]
      %v816 = vld [vmem:[%s7] sm:$0xff]
      %v817 = vld [vmem:[%s7 + $0x8] sm:$0xff]
      %v818 = vld [vmem:[%s7 + $0x10] sm:$0xff]
      %v819 = vld [vmem:[%s7 + $0x18] sm:$0xff]
      %v820 = vld [vmem:[%s8] sm:$0xff]
      %v821 = vld [vmem:[%s8 + $0x8] sm:$0xff]
      %v822 = vld [vmem:[%s8 + $0x10] sm:$0xff]
      %v823 = vld [vmem:[%s8 + $0x18] sm:$0xff]
      %v825 = vsel %vm474, %v811, 0
      %v828 = vsel %vm474, %v812, 0
      %v831 = vsel %vm474, %v813, 0
      %v834 = vsel %vm474, %v814, 0
      %836 = vmatprep.subr.mxu0 0.0
      %837 = vmatpush1.msra.mxu0 %v809
      %838 = vmatprep.subr.mxu0 0.0
      %839 = vmatpush1.msra.mxu0 %v810
      %840 = vmatprep.subr.mxu0 0.0
      %841 = vmatpush1.msra.mxu0 0.0
      %842 = vmatprep.subr.mxu0 0.0
      %843 = vmatpush1.msra.mxu0 0.0
      %844 = vmatprep.subr.mxu0 0.0
      %845 = vmatpush1.msra.mxu0 0.0
      %846 = vmatprep.subr.mxu0 0.0
      %847 = vmatpush1.msra.mxu0 0.0
      %848 = vmatprep.subr.mxu0 0.0
      %849 = vmatpush1.msra.mxu0 0.0
      %850 = vmatprep.subr.mxu0 0.0
      %851 = vmatpush1.msra.mxu0 0.0
      %852 = vmatprep.subr.mxu0 0.0
      %853 = vmatpush1.msra.mxu0 0.0
      %854 = vmatprep.subr.mxu0 0.0
      %855 = vmatpush1.msra.mxu0 0.0
      %856 = vmatprep.subr.mxu0 0.0
      %857 = vmatpush1.msra.mxu0 0.0
      %858 = vmatprep.subr.mxu0 0.0
      %859 = vmatpush1.msra.mxu0 0.0
      %860 = vmatprep.subr.mxu0 0.0
      %861 = vmatpush1.msra.mxu0 0.0
      %862 = vmatprep.subr.mxu0 0.0
      %863 = vmatpush1.msra.mxu0 0.0
      %864 = vmatprep.subr.mxu0 0.0
      %865 = vmatpush1.msra.mxu0 0.0
      %866 = vmatprep.subr.mxu0 0.0
      %867 = vmatpush1.msra.mxu0 0.0
      %868 = vmatprep.subr.mxu0 0.0
      %869 = vmatpush1.msra.mxu0 0.0
      %870 = vmatprep.subr.mxu0 0.0
      %871 = vmatpush1.msra.mxu0 0.0
      %872 = vmatprep.subr.mxu0 0.0
      %873 = vmatpush1.msra.mxu0 0.0
      %874 = vmatprep.subr.mxu0 0.0
      %875 = vmatpush1.msra.mxu0 0.0
      %876 = vmatprep.subr.mxu0 0.0
      %877 = vmatpush1.msra.mxu0 0.0
      %878 = vmatprep.subr.mxu0 0.0
      %879 = vmatpush1.msra.mxu0 0.0
      %880 = vmatprep.subr.mxu0 0.0
      %881 = vmatpush1.msra.mxu0 0.0
      %882 = vmatprep.subr.mxu0 0.0
      %883 = vmatpush1.msra.mxu0 0.0
      %884 = vmatprep.subr.mxu0 0.0
      %885 = vmatpush1.msra.mxu0 0.0
      %886 = vmatprep.subr.mxu0 0.0
      %887 = vmatpush1.msra.mxu0 0.0
      %888 = vmatprep.subr.mxu0 0.0
      %889 = vmatpush1.msra.mxu0 0.0
      %890 = vmatprep.subr.mxu0 0.0
      %891 = vmatpush1.msra.mxu0 0.0
      %892 = vmatprep.subr.mxu0 0.0
      %893 = vmatpush1.msra.mxu0 0.0
      %894 = vmatprep.subr.mxu0 0.0
      %895 = vmatpush1.msra.mxu0 0.0
      %896 = vmatprep.subr.mxu0 0.0
      %897 = vmatpush1.msra.mxu0 0.0
      %898 = vmatprep.subr.mxu0 0.0
      %899 = vmatpush1.msra.mxu0 0.0
      %900 = vmatprep.mubr.f32.mxu0 0.0
      %901 = vmatmul.mubr.f32.gmra.mrb[0].mxu0 %v825
      %v902 = vpop.f32.mrb[0].mxu0
      %v903 = vadd.f32 0.0, %v902
      %v904 = vpop.f32.mrb[0].mxu0
      %905 = vmatprep.mubr.f32.mxu0 0.0
      %906 = vmatmul.mubr.f32.gmra.mrb[0].mxu0 %v828
      %v907 = vpop.f32.mrb[0].mxu0
      %v908 = vadd.f32 0.0, %v907
      %v909 = vpop.f32.mrb[0].mxu0
      %910 = vmatprep.mubr.f32.mxu0 0.0
      %911 = vmatmul.mubr.f32.gmra.mrb[0].mxu0 %v831
      %v912 = vpop.f32.mrb[0].mxu0
      %v913 = vadd.f32 0.0, %v912
      %v914 = vpop.f32.mrb[0].mxu0
      %915 = vmatprep.mubr.f32.mxu0 0.0
      %916 = vmatmul.mubr.f32.gmra.mrb[0].mxu0 %v834
      %v917 = vpop.f32.mrb[0].mxu0
      %v918 = vadd.f32 0.0, %v917
      %v919 = vpop.f32.mrb[0].mxu0
      %920 = vdwg.mxu0
      %921 = vadd.xlane.f32.xlu0 %v903
      %v922 = vpop.xlane.xlu0 %921
      %923 = vadd.xlane.f32.xlu0 %v908
      %v924 = vpop.xlane.xlu0 %923
      %925 = vadd.xlane.f32.xlu0 %v913
      %v926 = vpop.xlane.xlu0 %925
      %927 = vadd.xlane.f32.xlu0 %v918
      %v928 = vpop.xlane.xlu0 %927
      %v929 = vmul.f32 %v903, %v903
      %v930 = vmul.f32 %v908, %v908
      %v931 = vmul.f32 %v913, %v913
      %v932 = vmul.f32 %v918, %v918
      %933 = vadd.xlane.f32.xlu0 %v929
      %v934 = vpop.xlane.xlu0 %933
      %935 = vadd.xlane.f32.xlu0 %v930
      %v936 = vpop.xlane.xlu0 %935
      %937 = vadd.xlane.f32.xlu0 %v931
      %v938 = vpop.xlane.xlu0 %937
      %939 = vadd.xlane.f32.xlu0 %v932
      %v940 = vpop.xlane.xlu0 %939
      %vm941 = vcmask 261120
      %v943 = vsel %vm941, %v815, 0
      %945 = vmatprep.subr.mxu0 0.0
      %946 = vmatpush1.msra.mxu0 %v922
      %947 = vmatprep.subr.mxu0 0.0
      %948 = vmatpush1.msra.mxu0 %v924
      %949 = vmatprep.subr.mxu0 0.0
      %950 = vmatpush1.msra.mxu0 %v926
      %951 = vmatprep.subr.mxu0 0.0
      %952 = vmatpush1.msra.mxu0 %v928
      %953 = vmatprep.subr.mxu0 0.0
      %954 = vmatpush1.msra.mxu0 0.0
      %955 = vmatprep.subr.mxu0 0.0
      %956 = vmatpush1.msra.mxu0 0.0
      %957 = vmatprep.subr.mxu0 0.0
      %958 = vmatpush1.msra.mxu0 0.0
      %959 = vmatprep.subr.mxu0 0.0
      %960 = vmatpush1.msra.mxu0 0.0
      %961 = vmatprep.subr.mxu0 0.0
      %962 = vmatpush1.msra.mxu0 0.0
      %963 = vmatprep.subr.mxu0 0.0
      %964 = vmatpush1.msra.mxu0 0.0
      %965 = vmatprep.subr.mxu0 0.0
      %966 = vmatpush1.msra.mxu0 0.0
      %967 = vmatprep.subr.mxu0 0.0
      %968 = vmatpush1.msra.mxu0 0.0
      %969 = vmatprep.subr.mxu0 0.0
      %970 = vmatpush1.msra.mxu0 0.0
      %971 = vmatprep.subr.mxu0 0.0
      %972 = vmatpush1.msra.mxu0 0.0
      %973 = vmatprep.subr.mxu0 0.0
      %974 = vmatpush1.msra.mxu0 0.0
      %975 = vmatprep.subr.mxu0 0.0
      %976 = vmatpush1.msra.mxu0 0.0
      %977 = vmatprep.subr.mxu0 0.0
      %978 = vmatpush1.msra.mxu0 0.0
      %979 = vmatprep.subr.mxu0 0.0
      %980 = vmatpush1.msra.mxu0 0.0
      %981 = vmatprep.subr.mxu0 0.0
      %982 = vmatpush1.msra.mxu0 0.0
      %983 = vmatprep.subr.mxu0 0.0
      %984 = vmatpush1.msra.mxu0 0.0
      %985 = vmatprep.subr.mxu0 0.0
      %986 = vmatpush1.msra.mxu0 0.0
      %987 = vmatprep.subr.mxu0 0.0
      %988 = vmatpush1.msra.mxu0 0.0
      %989 = vmatprep.subr.mxu0 0.0
      %990 = vmatpush1.msra.mxu0 0.0
      %991 = vmatprep.subr.mxu0 0.0
      %992 = vmatpush1.msra.mxu0 0.0
      %993 = vmatprep.subr.mxu0 0.0
      %994 = vmatpush1.msra.mxu0 0.0
      %995 = vmatprep.subr.mxu0 0.0
      %996 = vmatpush1.msra.mxu0 0.0
      %997 = vmatprep.subr.mxu0 0.0
      %998 = vmatpush1.msra.mxu0 0.0
      %999 = vmatprep.subr.mxu0 0.0
      %1000 = vmatpush1.msra.mxu0 0.0
      %1001 = vmatprep.subr.mxu0 0.0
      %1002 = vmatpush1.msra.mxu0 0.0
      %1003 = vmatprep.subr.mxu0 0.0
      %1004 = vmatpush1.msra.mxu0 0.0
      %1005 = vmatprep.subr.mxu0 0.0
      %1006 = vmatpush1.msra.mxu0 0.0
      %1007 = vmatprep.subr.mxu0 0.0
      %1008 = vmatpush1.msra.mxu0 0.0
      %1009 = vmatprep.mubr.f32.mxu0 0.0
      %1010 = vmatmul.mubr.f32.gmra.mrb[0].mxu0 %v943
      %v1011 = vpop.f32.mrb[0].mxu0
      %v1012 = vadd.f32 0.0, %v1011
      %v1013 = vpop.f32.mrb[0].mxu0
      %1014 = vdwg.mxu0
      %1015 = vmatprep.subr.mxu0 0.0
      %1016 = vmatpush1.msra.mxu0 %v934
      %1017 = vmatprep.subr.mxu0 0.0
      %1018 = vmatpush1.msra.mxu0 %v936
      %1019 = vmatprep.subr.mxu0 0.0
      %1020 = vmatpush1.msra.mxu0 %v938
      %1021 = vmatprep.subr.mxu0 0.0
      %1022 = vmatpush1.msra.mxu0 %v940
      %1023 = vmatprep.subr.mxu0 0.0
      %1024 = vmatpush1.msra.mxu0 0.0
      %1025 = vmatprep.subr.mxu0 0.0
      %1026 = vmatpush1.msra.mxu0 0.0
      %1027 = vmatprep.subr.mxu0 0.0
      %1028 = vmatpush1.msra.mxu0 0.0
      %1029 = vmatprep.subr.mxu0 0.0
      %1030 = vmatpush1.msra.mxu0 0.0
      %1031 = vmatprep.subr.mxu0 0.0
      %1032 = vmatpush1.msra.mxu0 0.0
      %1033 = vmatprep.subr.mxu0 0.0
      %1034 = vmatpush1.msra.mxu0 0.0
      %1035 = vmatprep.subr.mxu0 0.0
      %1036 = vmatpush1.msra.mxu0 0.0
      %1037 = vmatprep.subr.mxu0 0.0
      %1038 = vmatpush1.msra.mxu0 0.0
      %1039 = vmatprep.subr.mxu0 0.0
      %1040 = vmatpush1.msra.mxu0 0.0
      %1041 = vmatprep.subr.mxu0 0.0
      %1042 = vmatpush1.msra.mxu0 0.0
      %1043 = vmatprep.subr.mxu0 0.0
      %1044 = vmatpush1.msra.mxu0 0.0
      %1045 = vmatprep.subr.mxu0 0.0
      %1046 = vmatpush1.msra.mxu0 0.0
      %1047 = vmatprep.subr.mxu0 0.0
      %1048 = vmatpush1.msra.mxu0 0.0
      %1049 = vmatprep.subr.mxu0 0.0
      %1050 = vmatpush1.msra.mxu0 0.0
      %1051 = vmatprep.subr.mxu0 0.0
      %1052 = vmatpush1.msra.mxu0 0.0
      %1053 = vmatprep.subr.mxu0 0.0
      %1054 = vmatpush1.msra.mxu0 0.0
      %1055 = vmatprep.subr.mxu0 0.0
      %1056 = vmatpush1.msra.mxu0 0.0
      %1057 = vmatprep.subr.mxu0 0.0
      %1058 = vmatpush1.msra.mxu0 0.0
      %1059 = vmatprep.subr.mxu0 0.0
      %1060 = vmatpush1.msra.mxu0 0.0
      %1061 = vmatprep.subr.mxu0 0.0
      %1062 = vmatpush1.msra.mxu0 0.0
      %1063 = vmatprep.subr.mxu0 0.0
      %1064 = vmatpush1.msra.mxu0 0.0
      %1065 = vmatprep.subr.mxu0 0.0
      %1066 = vmatpush1.msra.mxu0 0.0
      %1067 = vmatprep.subr.mxu0 0.0
      %1068 = vmatpush1.msra.mxu0 0.0
      %1069 = vmatprep.subr.mxu0 0.0
      %1070 = vmatpush1.msra.mxu0 0.0
      %1071 = vmatprep.subr.mxu0 0.0
      %1072 = vmatpush1.msra.mxu0 0.0
      %1073 = vmatprep.subr.mxu0 0.0
      %1074 = vmatpush1.msra.mxu0 0.0
      %1075 = vmatprep.subr.mxu0 0.0
      %1076 = vmatpush1.msra.mxu0 0.0
      %1077 = vmatprep.subr.mxu0 0.0
      %1078 = vmatpush1.msra.mxu0 0.0
      %1079 = vmatprep.mubr.f32.mxu0 0.0
      %1080 = vmatmul.mubr.f32.gmra.mrb[0].mxu0 %v943
      %v1081 = vpop.f32.mrb[0].mxu0
      %v1082 = vadd.f32 0.0, %v1081
      %v1083 = vpop.f32.mrb[0].mxu0
      %1084 = vdwg.mxu0
      %v1085 = vmul.f32 %v1012, 0.001953125
      %v1086 = vmul.f32 %v1082, 0.001953125
      %v1087 = vmul.f32 %v1085, %v1085
      %v1088 = vsub.f32 %v1086, %v1087
      %v1089 = vmax.f32 %v1088, 0.0
      %v1090 = vadd.f32 %v1089, 1e-05
      %v1091 = vrsqrt.pop %v1090
      %v1093 = vsel %vm625, %v816, 0
      %v1096 = vsel %vm625, %v817, 0
      %v1099 = vsel %vm625, %v818, 0
      %v1102 = vsel %vm625, %v819, 0
      %1104 = vmatprep.subr.mxu0 0.0
      %1105 = vmatpush1.msra.mxu0 %v1091
      %1106 = vmatprep.subr.mxu0 0.0
      %1107 = vmatpush1.msra.mxu0 0.0
      %1108 = vmatprep.subr.mxu0 0.0
      %1109 = vmatpush1.msra.mxu0 0.0
      %1110 = vmatprep.subr.mxu0 0.0
      %1111 = vmatpush1.msra.mxu0 0.0
      %1112 = vmatprep.subr.mxu0 0.0
      %1113 = vmatpush1.msra.mxu0 0.0
      %1114 = vmatprep.subr.mxu0 0.0
      %1115 = vmatpush1.msra.mxu0 0.0
      %1116 = vmatprep.subr.mxu0 0.0
      %1117 = vmatpush1.msra.mxu0 0.0
      %1118 = vmatprep.subr.mxu0 0.0
      %1119 = vmatpush1.msra.mxu0 0.0
      %1120 = vmatprep.subr.mxu0 0.0
      %1121 = vmatpush1.msra.mxu0 0.0
      %1122 = vmatprep.subr.mxu0 0.0
      %1123 = vmatpush1.msra.mxu0 0.0
      %1124 = vmatprep.subr.mxu0 0.0
      %1125 = vmatpush1.msra.mxu0 0.0
      %1126 = vmatprep.subr.mxu0 0.0
      %1127 = vmatpush1.msra.mxu0 0.0
      %1128 = vmatprep.subr.mxu0 0.0
      %1129 = vmatpush1.msra.mxu0 0.0
      %1130 = vmatprep.subr.mxu0 0.0
      %1131 = vmatpush1.msra.mxu0 0.0
      %1132 = vmatprep.subr.mxu0 0.0
      %1133 = vmatpush1.msra.mxu0 0.0
      %1134 = vmatprep.subr.mxu0 0.0
      %1135 = vmatpush1.msra.mxu0 0.0
      %1136 = vmatprep.subr.mxu0 0.0
      %1137 = vmatpush1.msra.mxu0 0.0
      %1138 = vmatprep.subr.mxu0 0.0
      %1139 = vmatpush1.msra.mxu0 0.0
      %1140 = vmatprep.subr.mxu0 0.0
      %1141 = vmatpush1.msra.mxu0 0.0
      %1142 = vmatprep.subr.mxu0 0.0
      %1143 = vmatpush1.msra.mxu0 0.0
      %1144 = vmatprep.subr.mxu0 0.0
      %1145 = vmatpush1.msra.mxu0 0.0
      %1146 = vmatprep.subr.mxu0 0.0
      %1147 = vmatpush1.msra.mxu0 0.0
      %1148 = vmatprep.subr.mxu0 0.0
      %1149 = vmatpush1.msra.mxu0 0.0
      %1150 = vmatprep.subr.mxu0 0.0
      %1151 = vmatpush1.msra.mxu0 0.0
      %1152 = vmatprep.subr.mxu0 0.0
      %1153 = vmatpush1.msra.mxu0 0.0
      %1154 = vmatprep.subr.mxu0 0.0
      %1155 = vmatpush1.msra.mxu0 0.0
      %1156 = vmatprep.subr.mxu0 0.0
      %1157 = vmatpush1.msra.mxu0 0.0
      %1158 = vmatprep.subr.mxu0 0.0
      %1159 = vmatpush1.msra.mxu0 0.0
      %1160 = vmatprep.subr.mxu0 0.0
      %1161 = vmatpush1.msra.mxu0 0.0
      %1162 = vmatprep.subr.mxu0 0.0
      %1163 = vmatpush1.msra.mxu0 0.0
      %1164 = vmatprep.subr.mxu0 0.0
      %1165 = vmatpush1.msra.mxu0 0.0
      %1166 = vmatprep.subr.mxu0 0.0
      %1167 = vmatpush1.msra.mxu0 0.0
      %1168 = vmatprep.mubr.f32.mxu0 0.0
      %1169 = vmatmul.mubr.f32.gmra.mrb[0].mxu0 %v1093
      %v1170 = vpop.f32.mrb[0].mxu0
      %v1171 = vadd.f32 0.0, %v1170
      %v1172 = vpop.f32.mrb[0].mxu0
      %1173 = vmatprep.mubr.f32.mxu0 0.0
      %1174 = vmatmul.mubr.f32.gmra.mrb[0].mxu0 %v1096
      %v1175 = vpop.f32.mrb[0].mxu0
      %v1176 = vadd.f32 0.0, %v1175
      %v1177 = vpop.f32.mrb[0].mxu0
      %1178 = vmatprep.mubr.f32.mxu0 0.0
      %1179 = vmatmul.mubr.f32.gmra.mrb[0].mxu0 %v1099
      %v1180 = vpop.f32.mrb[0].mxu0
      %v1181 = vadd.f32 0.0, %v1180
      %v1182 = vpop.f32.mrb[0].mxu0
      %1183 = vmatprep.mubr.f32.mxu0 0.0
      %1184 = vmatmul.mubr.f32.gmra.mrb[0].mxu0 %v1102
      %v1185 = vpop.f32.mrb[0].mxu0
      %v1186 = vadd.f32 0.0, %v1185
      %v1187 = vpop.f32.mrb[0].mxu0
      %1188 = vdwg.mxu0
      %v1189 = vmul.f32 %v1085, %v1091
      %1190 = vmatprep.subr.mxu0 0.0
      %1191 = vmatpush1.msra.mxu0 %v1189
      %1192 = vmatprep.subr.mxu0 0.0
      %1193 = vmatpush1.msra.mxu0 0.0
      %1194 = vmatprep.subr.mxu0 0.0
      %1195 = vmatpush1.msra.mxu0 0.0
      %1196 = vmatprep.subr.mxu0 0.0
      %1197 = vmatpush1.msra.mxu0 0.0
      %1198 = vmatprep.subr.mxu0 0.0
      %1199 = vmatpush1.msra.mxu0 0.0
      %1200 = vmatprep.subr.mxu0 0.0
      %1201 = vmatpush1.msra.mxu0 0.0
      %1202 = vmatprep.subr.mxu0 0.0
      %1203 = vmatpush1.msra.mxu0 0.0
      %1204 = vmatprep.subr.mxu0 0.0
      %1205 = vmatpush1.msra.mxu0 0.0
      %1206 = vmatprep.subr.mxu0 0.0
      %1207 = vmatpush1.msra.mxu0 0.0
      %1208 = vmatprep.subr.mxu0 0.0
      %1209 = vmatpush1.msra.mxu0 0.0
      %1210 = vmatprep.subr.mxu0 0.0
      %1211 = vmatpush1.msra.mxu0 0.0
      %1212 = vmatprep.subr.mxu0 0.0
      %1213 = vmatpush1.msra.mxu0 0.0
      %1214 = vmatprep.subr.mxu0 0.0
      %1215 = vmatpush1.msra.mxu0 0.0
      %1216 = vmatprep.subr.mxu0 0.0
      %1217 = vmatpush1.msra.mxu0 0.0
      %1218 = vmatprep.subr.mxu0 0.0
      %1219 = vmatpush1.msra.mxu0 0.0
      %1220 = vmatprep.subr.mxu0 0.0
      %1221 = vmatpush1.msra.mxu0 0.0
      %1222 = vmatprep.subr.mxu0 0.0
      %1223 = vmatpush1.msra.mxu0 0.0
      %1224 = vmatprep.subr.mxu0 0.0
      %1225 = vmatpush1.msra.mxu0 0.0
      %1226 = vmatprep.subr.mxu0 0.0
      %1227 = vmatpush1.msra.mxu0 0.0
      %1228 = vmatprep.subr.mxu0 0.0
      %1229 = vmatpush1.msra.mxu0 0.0
      %1230 = vmatprep.subr.mxu0 0.0
      %1231 = vmatpush1.msra.mxu0 0.0
      %1232 = vmatprep.subr.mxu0 0.0
      %1233 = vmatpush1.msra.mxu0 0.0
      %1234 = vmatprep.subr.mxu0 0.0
      %1235 = vmatpush1.msra.mxu0 0.0
      %1236 = vmatprep.subr.mxu0 0.0
      %1237 = vmatpush1.msra.mxu0 0.0
      %1238 = vmatprep.subr.mxu0 0.0
      %1239 = vmatpush1.msra.mxu0 0.0
      %1240 = vmatprep.subr.mxu0 0.0
      %1241 = vmatpush1.msra.mxu0 0.0
      %1242 = vmatprep.subr.mxu0 0.0
      %1243 = vmatpush1.msra.mxu0 0.0
      %1244 = vmatprep.subr.mxu0 0.0
      %1245 = vmatpush1.msra.mxu0 0.0
      %1246 = vmatprep.subr.mxu0 0.0
      %1247 = vmatpush1.msra.mxu0 0.0
      %1248 = vmatprep.subr.mxu0 0.0
      %1249 = vmatpush1.msra.mxu0 0.0
      %1250 = vmatprep.subr.mxu0 0.0
      %1251 = vmatpush1.msra.mxu0 0.0
      %1252 = vmatprep.subr.mxu0 0.0
      %1253 = vmatpush1.msra.mxu0 0.0
      %1254 = vmatprep.mubr.f32.mxu0 0.0
      %1255 = vmatmul.mubr.f32.gmra.mrb[0].mxu0 %v1093
      %v1256 = vpop.f32.mrb[0].mxu0
      %v1257 = vadd.f32 0.0, %v1256
      %v1258 = vpop.f32.mrb[0].mxu0
      %1259 = vmatprep.mubr.f32.mxu0 0.0
      %1260 = vmatmul.mubr.f32.gmra.mrb[0].mxu0 %v1096
      %v1261 = vpop.f32.mrb[0].mxu0
      %v1262 = vadd.f32 0.0, %v1261
      %v1263 = vpop.f32.mrb[0].mxu0
      %1264 = vmatprep.mubr.f32.mxu0 0.0
      %1265 = vmatmul.mubr.f32.gmra.mrb[0].mxu0 %v1099
      %v1266 = vpop.f32.mrb[0].mxu0
      %v1267 = vadd.f32 0.0, %v1266
      %v1268 = vpop.f32.mrb[0].mxu0
      %1269 = vmatprep.mubr.f32.mxu0 0.0
      %1270 = vmatmul.mubr.f32.gmra.mrb[0].mxu0 %v1102
      %v1271 = vpop.f32.mrb[0].mxu0
      %v1272 = vadd.f32 0.0, %v1271
      %v1273 = vpop.f32.mrb[0].mxu0
      %1274 = vdwg.mxu0
      %v1275 = vsub.f32 %v820, %v1257
      %v1276 = vsub.f32 %v821, %v1262
      %v1277 = vsub.f32 %v822, %v1267
      %v1278 = vsub.f32 %v823, %v1272
      %1280 = vset.pattern.permute.xlu0 0
      %1281 = vperm.xlu0 %1280, %v1171
      %v1282 = vpop.permute.xlu0 %1281
      %1285 = vset.pattern.permute.xlu0 0
      %1286 = vperm.xlu0 %1285, %v1176
      %v1287 = vpop.permute.xlu0 %1286
      %1290 = vset.pattern.permute.xlu0 0
      %1291 = vperm.xlu0 %1290, %v1181
      %v1292 = vpop.permute.xlu0 %1291
      %1295 = vset.pattern.permute.xlu0 0
      %1296 = vperm.xlu0 %1295, %v1186
      %v1297 = vpop.permute.xlu0 %1296
      %v1299 = vmul.f32 %v903, %v1282
      %v1300 = vmul.f32 %v908, %v1287
      %v1301 = vmul.f32 %v913, %v1292
      %v1302 = vmul.f32 %v918, %v1297
      %1304 = vset.pattern.permute.xlu0 0
      %1305 = vperm.xlu0 %1304, %v1275
      %v1306 = vpop.permute.xlu0 %1305
      %1309 = vset.pattern.permute.xlu0 0
      %1310 = vperm.xlu0 %1309, %v1276
      %v1311 = vpop.permute.xlu0 %1310
      %1314 = vset.pattern.permute.xlu0 0
      %1315 = vperm.xlu0 %1314, %v1277
      %v1316 = vpop.permute.xlu0 %1315
      %1319 = vset.pattern.permute.xlu0 0
      %1320 = vperm.xlu0 %1319, %v1278
      %v1321 = vpop.permute.xlu0 %1320
      %v1323 = vadd.f32 %v1299, %v1306
      %v1324 = vadd.f32 %v1300, %v1311
      %v1325 = vadd.f32 %v1301, %v1316
      %v1326 = vadd.f32 %v1302, %v1321
      %1331 = vrot.lane.b32.xlu0 %v1323, 112
      %v1332 = vpop.permute.xlu0 %1331
      %1333 = vrot.lane.b32.xlu0 %v1324, 112
      %v1334 = vpop.permute.xlu0 %1333
      %1335 = vrot.lane.b32.xlu0 %v1325, 112
      %v1336 = vpop.permute.xlu0 %1335
      %1337 = vrot.lane.b32.xlu0 %v1326, 112
      %v1338 = vpop.permute.xlu0 %1337
      %v1343 = vmax.f32 %v1323, %v1332
      %v1344 = vmax.f32 %v1324, %v1334
      %v1345 = vmax.f32 %v1325, %v1336
      %v1346 = vmax.f32 %v1326, %v1338
      %1347 = vrot.lane.b32.xlu0 %v1323, 96
      %v1348 = vpop.permute.xlu0 %1347
      %1349 = vrot.lane.b32.xlu0 %v1324, 96
      %v1350 = vpop.permute.xlu0 %1349
      %1351 = vrot.lane.b32.xlu0 %v1325, 96
      %v1352 = vpop.permute.xlu0 %1351
      %1353 = vrot.lane.b32.xlu0 %v1326, 96
      %v1354 = vpop.permute.xlu0 %1353
      %v1359 = vmax.f32 %v1343, %v1348
      %v1360 = vmax.f32 %v1344, %v1350
      %v1361 = vmax.f32 %v1345, %v1352
      %v1362 = vmax.f32 %v1346, %v1354
      %1363 = vrot.lane.b32.xlu0 %v1323, 80
      %v1364 = vpop.permute.xlu0 %1363
      %1365 = vrot.lane.b32.xlu0 %v1324, 80
      %v1366 = vpop.permute.xlu0 %1365
      %1367 = vrot.lane.b32.xlu0 %v1325, 80
      %v1368 = vpop.permute.xlu0 %1367
      %1369 = vrot.lane.b32.xlu0 %v1326, 80
      %v1370 = vpop.permute.xlu0 %1369
      %v1375 = vmax.f32 %v1359, %v1364
      %v1376 = vmax.f32 %v1360, %v1366
      %v1377 = vmax.f32 %v1361, %v1368
      %v1378 = vmax.f32 %v1362, %v1370
      %1379 = vrot.lane.b32.xlu0 %v1323, 64
      %v1380 = vpop.permute.xlu0 %1379
      %1381 = vrot.lane.b32.xlu0 %v1324, 64
      %v1382 = vpop.permute.xlu0 %1381
      %1383 = vrot.lane.b32.xlu0 %v1325, 64
      %v1384 = vpop.permute.xlu0 %1383
      %1385 = vrot.lane.b32.xlu0 %v1326, 64
      %v1386 = vpop.permute.xlu0 %1385
      %v1391 = vmax.f32 %v1375, %v1380
      %v1392 = vmax.f32 %v1376, %v1382
      %v1393 = vmax.f32 %v1377, %v1384
      %v1394 = vmax.f32 %v1378, %v1386
      %1395 = vrot.lane.b32.xlu0 %v1323, 48
      %v1396 = vpop.permute.xlu0 %1395
      %1397 = vrot.lane.b32.xlu0 %v1324, 48
      %v1398 = vpop.permute.xlu0 %1397
      %1399 = vrot.lane.b32.xlu0 %v1325, 48
      %v1400 = vpop.permute.xlu0 %1399
      %1401 = vrot.lane.b32.xlu0 %v1326, 48
      %v1402 = vpop.permute.xlu0 %1401
      %v1407 = vmax.f32 %v1391, %v1396
      %v1408 = vmax.f32 %v1392, %v1398
      %v1409 = vmax.f32 %v1393, %v1400
      %v1410 = vmax.f32 %v1394, %v1402
      %1411 = vrot.lane.b32.xlu0 %v1323, 32
      %v1412 = vpop.permute.xlu0 %1411
      %1413 = vrot.lane.b32.xlu0 %v1324, 32
      %v1414 = vpop.permute.xlu0 %1413
      %1415 = vrot.lane.b32.xlu0 %v1325, 32
      %v1416 = vpop.permute.xlu0 %1415
      %1417 = vrot.lane.b32.xlu0 %v1326, 32
      %v1418 = vpop.permute.xlu0 %1417
      %v1423 = vmax.f32 %v1407, %v1412
      %v1424 = vmax.f32 %v1408, %v1414
      %v1425 = vmax.f32 %v1409, %v1416
      %v1426 = vmax.f32 %v1410, %v1418
      %1427 = vrot.lane.b32.xlu0 %v1323, 16
      %v1428 = vpop.permute.xlu0 %1427
      %1429 = vrot.lane.b32.xlu0 %v1324, 16
      %v1430 = vpop.permute.xlu0 %1429
      %1431 = vrot.lane.b32.xlu0 %v1325, 16
      %v1432 = vpop.permute.xlu0 %1431
      %1433 = vrot.lane.b32.xlu0 %v1326, 16
      %v1434 = vpop.permute.xlu0 %1433
      %v1439 = vmax.f32 %v1423, %v1428
      %v1440 = vmax.f32 %v1424, %v1430
      %v1441 = vmax.f32 %v1425, %v1432
      %v1442 = vmax.f32 %v1426, %v1434
      %1443 = vst.msk [vmem:[%s369] sm:$0xff] %vm474, %v1439
      %1444 = vst.msk [vmem:[%s369 + $0x8] sm:$0xff] %vm474, %v1440
      %1445 = vst.msk [vmem:[%s369 + $0x10] sm:$0xff] %vm474, %v1441
      %1446 = vst.msk [vmem:[%s369 + $0x18] sm:$0xff] %vm474, %v1442
      %v1447 = vmax.f32 %v1439, 0.0
      %v1448 = vmax.f32 %v1440, 0.0
      %v1449 = vmax.f32 %v1441, 0.0
      %v1450 = vmax.f32 %v1442, 0.0
      %1451 = vst.msk [vmem:[%s364] sm:$0xff] %vm474, %v1447
      %1452 = vst.msk [vmem:[%s364 + $0x8] sm:$0xff] %vm474, %v1448
      %1453 = vst.msk [vmem:[%s364 + $0x10] sm:$0xff] %vm474, %v1449
      %1454 = vst.msk [vmem:[%s364 + $0x18] sm:$0xff] %vm474, %v1450
      %p1455 = scmp.lt.s32.totalorder %s22, 1
      %s1456 = scalar_select %p1455, %s22, 1
      %s1457 = smul.addr %s1456, 4
      %s1458 = smul.addr %s1457, 8
      %s1459 = scalar_lea.vmem %s9, %s1458
      %p1460 = scmp.lt.s32.totalorder %s22, 1
      %s1461 = scalar_select %p1460, %s22, 1
      %s1462 = smul.addr %s1461, 4
      %s1463 = smul.addr %s1462, 8
      %s1464 = scalar_lea.vmem %s10, %s1463
      // Predicated region
      $region57: #{tpu_custom_call.1} parent=55 // pred_check
        %p1465 = pneg %p234
      $region58: #{tpu_custom_call.1} parent=55 // pred_check_branch
        %1467 = sbr.rel (%p1465) target = $region60
      $region59: #{tpu_custom_call.1} parent=55 // pred_region
        _
      $region60: #{tpu_custom_call.1} parent=55 // pred_fallthru
        _
      // Predicated region
      $region61: #{tpu_custom_call.1} parent=55 // pred_check
        %p1468 = pneg %p260
      $region62: #{tpu_custom_call.1} parent=55 // pred_check_branch
        %1470 = sbr.rel (%p1468) target = $region64
      $region63: #{tpu_custom_call.1} parent=55 // pred_region
        _
      $region64: #{tpu_custom_call.1} parent=55 // pred_fallthru
        _
    $region56: #{tpu_custom_call.1} parent=5 // pred_fallthru
      _
    %p1471 = scmp.le.s32.totalorder 2, %s17
    // Predicated region
    $region65: #{tpu_custom_call.1} parent=5 // pred_check
      %p1472 = pneg %p1471
    $region66: #{tpu_custom_call.1} parent=5 // pred_check_branch
      %1474 = sbr.rel (%p1472) target = $region68
    $region67: #{tpu_custom_call.1} parent=5 // pred_region
      %s1475 = ssub.s32 %s17, 2
      // Predicated region
      $region69: #{tpu_custom_call.1} parent=67 // pred_check
        %p1476 = pneg %p240
      $region70: #{tpu_custom_call.1} parent=67 // pred_check_branch
        %1478 = sbr.rel (%p1476) target = $region72
      $region71: #{tpu_custom_call.1} parent=67 // pred_region
        %p1479 = scmp.lt.s32.totalorder %s23, 1
        %s1480 = scalar_select %p1479, %s23, 1
        %s1481 = smul.addr %s1480, 4
        %s1482 = smul.addr %s1481, 8
        %s1483 = scalar_lea.vmem %s9, %s1482
      $region72: #{tpu_custom_call.1} parent=67 // pred_fallthru
        _
      // Predicated region
      $region73: #{tpu_custom_call.1} parent=67 // pred_check
        %p1484 = pneg %p266
      $region74: #{tpu_custom_call.1} parent=67 // pred_check_branch
        %1486 = sbr.rel (%p1484) target = $region76
      $region75: #{tpu_custom_call.1} parent=67 // pred_region
        %p1487 = scmp.lt.s32.totalorder %s23, 1
        %s1488 = scalar_select %p1487, %s23, 1
        %s1489 = smul.addr %s1488, 4
        %s1490 = smul.addr %s1489, 8
        %s1491 = scalar_lea.vmem %s10, %s1490
      $region76: #{tpu_custom_call.1} parent=67 // pred_fallthru
        _
    $region68: #{tpu_custom_call.1} parent=5 // pred_fallthru
      _
  $region6: #{tpu_custom_call.1} parent=0 // loop_footer
    %s21 = sadd.s32 1, %s17
  $region7: #{tpu_custom_call.1} parent=0 // loop_footer_branch
    %16 = sbr.rel target = $region3
  $region8: #{tpu_custom_call.1} parent=0 // loop_exit
    _

</llo_original>
